<compile_context>
chip_gen: v5e
topology: v5e:2x2
jax: 0.10.0
libtpu: 0.0.40
codegen_flags: <defaults>
</compile_context>

<pallas_src>
import functools

import numpy as np
import jax
import jax.numpy as jnp
from jax.experimental import pallas as pl
from jax.experimental.pallas import tpu as pltpu

LANE = 128
GATE = 128     # lanes per gate slab ([fwd | bwd | zero-pad])
HPAD = 128     # padded fused-hidden width (one vreg)


def _bilstm_kernel(emb_ref,    # (T*BP, 2*E)   row t*BP+b = [x_t | x_{T-1-t}] (rows >= B zero-padded)
                   wx_ref,     # (2*E, 4*GATE) fused input weights, gate-major, vreg-aligned slabs
                   b_ref,      # (1, 4*GATE)   fused biases (b_ih + b_hh)
                   whh_ref,    # (HPAD, 4*GATE) fused recurrent weights (block-diag, zero-padded)
                   wout_ref,   # (2*HPAD, LANE_OUT) [Wf;0] over hf rows, [0;Wb] over hb rows
                   bout_ref,   # (1, LANE_OUT)
                   out_ref,    # (T*BP, LANE_OUT)
                   zx_s,       # VMEM (T*BP, 4*GATE) precomputed input projections
                   hf_s,       # VMEM (T*BP, HPAD)   fused h, indexed by forward time
                   hb_s,       # VMEM (T*BP, HPAD)   fused h, indexed by backward time
                   *, T, BP):
    # ---- 1) hoisted input projection: one matmul for all t / directions / gates ----
    zx_s[...] = (jnp.dot(emb_ref[...], wx_ref[...],
                         preferred_element_type=jnp.float32)
                 + b_ref[...])

    # ---- 2) fused fwd+bwd recurrence, fully unrolled ----
    h0 = jnp.zeros((BP, HPAD), jnp.float32)
    c0 = jnp.zeros((BP, HPAD), jnp.float32)

    def step(s, carry):
        h, c = carry
        row_f = pl.multiple_of(s * BP, BP)              # fwd output row block (time s)
        row_b = pl.multiple_of((T - 1 - s) * BP, BP)    # bwd output row block (time T-1-s)

        z = zx_s[pl.ds(row_f, BP), :] + jnp.dot(
            h, whh_ref[...], preferred_element_type=jnp.float32)   # (BP, 4*GATE)

        # Each gate is one full 128-lane vreg: zero-shift slices.
        i = jax.nn.sigmoid(z[:, 0 * GATE:1 * GATE])
        f = jax.nn.sigmoid(z[:, 1 * GATE:2 * GATE])
        g = jnp.tanh(z[:, 2 * GATE:3 * GATE])
        o = jax.nn.sigmoid(z[:, 3 * GATE:4 * GATE])
        c = f * c + i * g
        h = o * jnp.tanh(c)

        # Store the full fused h to both buffers; projection weights zero out
        # the wrong-direction lanes.
        hf_s[pl.ds(row_f, BP), :] = h
        hb_s[pl.ds(row_b, BP), :] = h
        return (h, c)

    jax.lax.fori_loop(0, T, step, (h0, c0), unroll=True)

    # ---- 3) final projection: flat, lane-dense (T*BP, LANE_OUT) matmul pair ----
    logits = (jnp.dot(hf_s[...], wout_ref[0:HPAD, :],
                      preferred_element_type=jnp.float32)
              + jnp.dot(hb_s[...], wout_ref[HPAD:2 * HPAD, :],
                        preferred_element_type=jnp.float32)
              + bout_ref[...])
    out_ref[...] = logits


def pack_params(params):
    """Repack per-direction PyTorch-layout params into the fused, vreg-aligned layout."""
    wih_f, whh_f, b_f = params['wih_f'], params['whh_f'], params['b_f']
    wih_b, whh_b, b_b = params['wih_b'], params['whh_b'], params['b_b']
    E, H4 = wih_f.shape
    Hh = H4 // 4
    assert 2 * Hh <= GATE

    wx = jnp.zeros((2 * E, 4 * GATE), jnp.float32)
    whh = jnp.zeros((HPAD, 4 * GATE), jnp.float32)
    bb = jnp.zeros((1, 4 * GATE), jnp.float32)
    for g in range(4):                      # PyTorch gate order i, f, g, o
        src = slice(g * Hh, (g + 1) * Hh)
        dst_f = slice(g * GATE, g * GATE + Hh)
        dst_b = slice(g * GATE + Hh, g * GATE + 2 * Hh)
        wx = wx.at[0:E, dst_f].set(wih_f[:, src])
        wx = wx.at[E:2 * E, dst_b].set(wih_b[:, src])
        whh = whh.at[0:Hh, dst_f].set(whh_f[:, src])
        whh = whh.at[Hh:2 * Hh, dst_b].set(whh_b[:, src])
        bb = bb.at[:, dst_f].set(b_f[:, src])
        bb = bb.at[:, dst_b].set(b_b[:, src])

    wout, bout = params['wout'], params['bout']        # (2*Hh, tagset), (1, tagset)
    tagset = wout.shape[1]
    lane_out = ((tagset + LANE - 1) // LANE) * LANE
    wout_p = jnp.zeros((2 * HPAD, lane_out), jnp.float32)
    # hf_s lanes 0..Hh-1 carry h_fwd(t); hb_s lanes Hh..2Hh-1 carry h_bwd(t).
    wout_p = wout_p.at[0:Hh, 0:tagset].set(wout[0:Hh])
    wout_p = wout_p.at[HPAD + Hh:HPAD + 2 * Hh, 0:tagset].set(wout[Hh:2 * Hh])
    bout_p = jnp.zeros((1, lane_out), jnp.float32).at[:, 0:tagset].set(bout)

    return dict(embedding=params['embedding'],
                wx=wx, whh=whh, b=bb, wout=wout_p, bout=bout_p)


@functools.partial(jax.jit, static_argnums=(2,))
def bilstm_forward(sentence, packed, tagset):
    """sentence: (B, T) int token ids. Returns (B, T, tagset) float32."""
    tok = sentence.astype(jnp.int32)
    emb = jnp.take(packed['embedding'], tok, axis=0)            # (B, T, E)
    B, T, E = emb.shape
    BP = ((B + 7) // 8) * 8                                     # pad batch rows to sublane tile
    emb_tm = jnp.transpose(emb, (1, 0, 2)).astype(jnp.float32)  # (T, B, E)
    emb_tm = jnp.pad(emb_tm, ((0, 0), (0, BP - B), (0, 0)))     # (T, BP, E), padded rows are zero
    # Fused input rows: [x_t | x_{T-1-t}] so one matmul feeds both directions.
    emb_fused = jnp.concatenate([emb_tm, emb_tm[::-1]], axis=-1)  # (T, BP, 2E)
    emb_fused = emb_fused.reshape(T * BP, 2 * E)

    G = packed['wx'].shape[1]
    lane_out = packed['wout'].shape[1]

    vmem = pl.BlockSpec(memory_space=pltpu.MemorySpace.VMEM)
    kernel = functools.partial(_bilstm_kernel, T=T, BP=BP)

    out_flat = pl.pallas_call(
        kernel,
        out_shape=jax.ShapeDtypeStruct((T * BP, lane_out), jnp.float32),
        in_specs=[vmem] * 6,
        out_specs=vmem,
        scratch_shapes=[pltpu.VMEM((T * BP, G), jnp.float32),
                        pltpu.VMEM((T * BP, HPAD), jnp.float32),
                        pltpu.VMEM((T * BP, HPAD), jnp.float32)],
    )(emb_fused, packed['wx'], packed['b'], packed['whh'],
      packed['wout'], packed['bout'])

    # Strip batch-row padding (independent garbage rows) and tag-lane padding.
    out = out_flat.reshape(T, BP, lane_out)[:, :B, :tagset]
    return jnp.transpose(out, (1, 0, 2))                        # (B, T, tagset)


def init_params(key, vocab_size, tagset_size, embedding_dim, hidden_dim):
    """PyTorch-default-style init (Embedding N(0,1) + padding row, U(-1/sqrt(n), 1/sqrt(n)))."""
    Hh = hidden_dim // 2
    ks = jax.random.split(key, 12)

    emb = jax.random.normal(ks[0], (vocab_size, embedding_dim), jnp.float32)
    emb = emb.at[vocab_size - 1].set(0.0)     # padding_idx = vocab_size - 1

    def u(k, shape, bound):
        return jax.random.uniform(k, shape, jnp.float32, -bound, bound)

    k_lstm = Hh ** -0.5
    # PyTorch LSTM weights W_ih (4Hh, E) / W_hh (4Hh, Hh); we store transposes.
    wih_f = u(ks[1], (embedding_dim, 4 * Hh), k_lstm)
    whh_f = u(ks[2], (Hh, 4 * Hh), k_lstm)
    b_f = (u(ks[3], (4 * Hh,), k_lstm) + u(ks[4], (4 * Hh,), k_lstm)).reshape(1, -1)

    wih_b = u(ks[5], (embedding_dim, 4 * Hh), k_lstm)
    whh_b = u(ks[6], (Hh, 4 * Hh), k_lstm)
    b_b = (u(ks[7], (4 * Hh,), k_lstm) + u(ks[8], (4 * Hh,), k_lstm)).reshape(1, -1)

    k_lin = hidden_dim ** -0.5
    # hidden2tag weight (tagset, hidden_dim) -> store transpose (hidden_dim, tagset)
    wout = u(ks[9], (hidden_dim, tagset_size), k_lin)
    bout = u(ks[10], (tagset_size,), k_lin).reshape(1, -1)

    return dict(embedding=emb,
                wih_f=wih_f, whh_f=whh_f, b_f=b_f,
                wih_b=wih_b, whh_b=whh_b, b_b=b_b,
                wout=wout, bout=bout)


def _reference_forward(sentence, params):
    """Plain-JAX mirror of the PyTorch module (for correctness checking)."""
    emb = jnp.take(params['embedding'], sentence.astype(jnp.int32), axis=0)
    emb = jnp.transpose(emb, (1, 0, 2)).astype(jnp.float32)     # (T, B, E)
    T, B, _ = emb.shape
    Hh = params['whh_f'].shape[0]

    def run(xs, wih, whh, b):
        def cell(carry, x_t):
            h, c = carry
            z = x_t @ wih + h @ whh + b
            i = jax.nn.sigmoid(z[:, 0 * Hh:1 * Hh])
            f = jax.nn.sigmoid(z[:, 1 * Hh:2 * Hh])
            g = jnp.tanh(z[:, 2 * Hh:3 * Hh])
            o = jax.nn.sigmoid(z[:, 3 * Hh:4 * Hh])
            c = f * c + i * g
            h = o * jnp.tanh(c)
            return (h, c), h
        h0 = jnp.zeros((B, Hh), jnp.float32)
        _, hs = jax.lax.scan(cell, (h0, h0), xs)
        return hs                                              # (T, B, Hh)

    h_f = run(emb, params['wih_f'], params['whh_f'], params['b_f'])
    h_b = run(emb[::-1], params['wih_b'], params['whh_b'], params['b_b'])[::-1]
    hcat = jnp.concatenate([h_f, h_b], axis=-1)
    logits = jnp.einsum('tbh,ho->tbo', hcat, params['wout']) + params['bout']
    return jnp.transpose(logits, (1, 0, 2))                    # (B, T, tagset)


if __name__ == "__main__":
    vocab_size = 50
    tagset_size = 10
    embedding_dim = 32
    hidden_dim = 32          # per-direction hidden = 16
    batch = 2
    seq = 8

    key = jax.random.PRNGKey(0)
    k_param, k_tok = jax.random.split(key)
    params = init_params(k_param, vocab_size, tagset_size, embedding_dim, hidden_dim)
    packed = pack_params(params)

    sentence = jax.random.randint(k_tok, (batch, seq), 0, vocab_size, jnp.int32)

    out = bilstm_forward(sentence, packed, tagset_size)
    out = jax.block_until_ready(out)

    assert out.shape == (batch, seq, tagset_size), out.shape
    assert out.dtype == jnp.float32

    ref = jax.block_until_ready(_reference_forward(sentence, params))
    np.testing.assert_allclose(np.asarray(out), np.asarray(ref), rtol=1e-4, atol=1e-4)

    print("KERNEL_OK")
</pallas_src>

<mosaic_0001>
module attributes {stable_mosaic.version = 11 : i64} {
  func.func @_bilstm_kernel(%arg0: memref<64x64xf32, #tpu.memory_space<vmem>>, %arg1: memref<64x512xf32, #tpu.memory_space<vmem>>, %arg2: memref<1x512xf32, #tpu.memory_space<vmem>>, %arg3: memref<128x512xf32, #tpu.memory_space<vmem>>, %arg4: memref<256x128xf32, #tpu.memory_space<vmem>>, %arg5: memref<1x128xf32, #tpu.memory_space<vmem>>, %arg6: memref<64x128xf32, #tpu.memory_space<vmem>>, %arg7: memref<64x512xf32, #tpu.memory_space<vmem>>, %arg8: memref<64x128xf32, #tpu.memory_space<vmem>>, %arg9: memref<64x128xf32, #tpu.memory_space<vmem>>) attributes {dimension_semantics = [], scalar_prefetch = 0 : i64, scratch_operands = 3 : i64, tpu.core_type = #tpu.core_type<tc>} {
    %c0 = arith.constant 0 : index
    %c0_0 = arith.constant 0 : index
    %0 = vector.load %arg0[%c0, %c0_0] : memref<64x64xf32, #tpu.memory_space<vmem>>, vector<64x64xf32>
    %c0_1 = arith.constant 0 : index
    %c0_2 = arith.constant 0 : index
    %1 = vector.load %arg1[%c0_1, %c0_2] : memref<64x512xf32, #tpu.memory_space<vmem>>, vector<64x512xf32>
    %cst = arith.constant dense<0.000000e+00> : vector<64x512xf32>
    %2 = tpu.matmul %0, %1, %cst {dimension_numbers = #tpu.dot_dimension_numbers<[1], [0], [0], [1], [0, 0, 1, 1], [], []>} : vector<64x64xf32>, vector<64x512xf32>, vector<64x512xf32> -> vector<64x512xf32>
    %c0_3 = arith.constant 0 : index
    %c0_4 = arith.constant 0 : index
    %3 = vector.load %arg2[%c0_3, %c0_4] : memref<1x512xf32, #tpu.memory_space<vmem>>, vector<1x512xf32>
    %4 = vector.broadcast %3 : vector<1x512xf32> to vector<64x512xf32>
    %5 = arith.addf %2, %4 : vector<64x512xf32>
    %c0_5 = arith.constant 0 : index
    %c0_6 = arith.constant 0 : index
    %6 = vector.load %arg7[%c0_5, %c0_6] : memref<64x512xf32, #tpu.memory_space<vmem>>, vector<64x512xf32>
    tpu.vector_store %arg7[%c0_5, %c0_6], %5 {strides = array<i32>} : memref<64x512xf32, #tpu.memory_space<vmem>>, vector<64x512xf32>,
    %cst_7 = arith.constant 0.000000e+00 : f32
    %7 = vector.broadcast %cst_7 : f32 to vector<8x128xf32>
    %cst_8 = arith.constant 0.000000e+00 : f32
    %8 = vector.broadcast %cst_8 : f32 to vector<8x128xf32>
    %c0_i32 = arith.constant 0 : i32
    %c8_i32 = arith.constant 8 : i32
    %9 = arith.muli %c0_i32, %c8_i32 : i32
    %10 = tpu.assume_multiple %9, 8 : i32
    %c7_i32 = arith.constant 7 : i32
    %11 = arith.subi %c7_i32, %c0_i32 : i32
    %c8_i32_9 = arith.constant 8 : i32
    %12 = arith.muli %11, %c8_i32_9 : i32
    %13 = tpu.assume_multiple %12, 8 : i32
    %14 = arith.index_cast %10 : i32 to index
    %c0_10 = arith.constant 0 : index
    %15 = vector.load %arg7[%14, %c0_10] : memref<64x512xf32, #tpu.memory_space<vmem>>, vector<8x512xf32>
    %c0_11 = arith.constant 0 : index
    %c0_12 = arith.constant 0 : index
    %16 = vector.load %arg3[%c0_11, %c0_12] : memref<128x512xf32, #tpu.memory_space<vmem>>, vector<128x512xf32>
    %cst_13 = arith.constant dense<0.000000e+00> : vector<8x512xf32>
    %17 = tpu.matmul %7, %16, %cst_13 {dimension_numbers = #tpu.dot_dimension_numbers<[1], [0], [0], [1], [0, 0, 1, 1], [], []>} : vector<8x128xf32>, vector<128x512xf32>, vector<8x512xf32> -> vector<8x512xf32>
    %18 = arith.addf %15, %17 : vector<8x512xf32>
    %19 = vector.extract_strided_slice %18 {offsets = [0, 0], sizes = [8, 128], strides = [1, 1]} : vector<8x512xf32> to vector<8x128xf32>
    %20 = arith.negf %19 : vector<8x128xf32>
    %21 = math.exp %20 : vector<8x128xf32>
    %cst_14 = arith.constant 1.000000e+00 : f32
    %22 = vector.broadcast %cst_14 : f32 to vector<8x128xf32>
    %23 = arith.addf %22, %21 : vector<8x128xf32>
    %24 = arith.divf %22, %23 : vector<8x128xf32>
    %25 = vector.extract_strided_slice %18 {offsets = [0, 128], sizes = [8, 128], strides = [1, 1]} : vector<8x512xf32> to vector<8x128xf32>
    %26 = arith.negf %25 : vector<8x128xf32>
    %27 = math.exp %26 : vector<8x128xf32>
    %cst_15 = arith.constant 1.000000e+00 : f32
    %28 = vector.broadcast %cst_15 : f32 to vector<8x128xf32>
    %29 = arith.addf %28, %27 : vector<8x128xf32>
    %30 = arith.divf %28, %29 : vector<8x128xf32>
    %31 = vector.extract_strided_slice %18 {offsets = [0, 256], sizes = [8, 128], strides = [1, 1]} : vector<8x512xf32> to vector<8x128xf32>
    %32 = math.tanh %31 : vector<8x128xf32>
    %33 = vector.extract_strided_slice %18 {offsets = [0, 384], sizes = [8, 128], strides = [1, 1]} : vector<8x512xf32> to vector<8x128xf32>
    %34 = arith.negf %33 : vector<8x128xf32>
    %35 = math.exp %34 : vector<8x128xf32>
    %cst_16 = arith.constant 1.000000e+00 : f32
    %36 = vector.broadcast %cst_16 : f32 to vector<8x128xf32>
    %37 = arith.addf %36, %35 : vector<8x128xf32>
    %38 = arith.divf %36, %37 : vector<8x128xf32>
    %39 = arith.mulf %30, %8 : vector<8x128xf32>
    %40 = arith.mulf %24, %32 : vector<8x128xf32>
    %41 = arith.addf %39, %40 : vector<8x128xf32>
    %42 = math.tanh %41 : vector<8x128xf32>
    %43 = arith.mulf %38, %42 : vector<8x128xf32>
    %44 = arith.index_cast %10 : i32 to index
    %c0_17 = arith.constant 0 : index
    %45 = vector.load %arg8[%44, %c0_17] : memref<64x128xf32, #tpu.memory_space<vmem>>, vector<8x128xf32>
    tpu.vector_store %arg8[%44, %c0_17], %43 {strides = array<i32>} : memref<64x128xf32, #tpu.memory_space<vmem>>, vector<8x128xf32>,
    %46 = arith.index_cast %13 : i32 to index
    %c0_18 = arith.constant 0 : index
    %47 = vector.load %arg9[%46, %c0_18] : memref<64x128xf32, #tpu.memory_space<vmem>>, vector<8x128xf32>
    tpu.vector_store %arg9[%46, %c0_18], %43 {strides = array<i32>} : memref<64x128xf32, #tpu.memory_space<vmem>>, vector<8x128xf32>,
    %c1_i32 = arith.constant 1 : i32
    %c8_i32_19 = arith.constant 8 : i32
    %48 = arith.muli %c1_i32, %c8_i32_19 : i32
    %49 = tpu.assume_multiple %48, 8 : i32
    %c7_i32_20 = arith.constant 7 : i32
    %50 = arith.subi %c7_i32_20, %c1_i32 : i32
    %c8_i32_21 = arith.constant 8 : i32
    %51 = arith.muli %50, %c8_i32_21 : i32
    %52 = tpu.assume_multiple %51, 8 : i32
    %53 = arith.index_cast %49 : i32 to index
    %c0_22 = arith.constant 0 : index
    %54 = vector.load %arg7[%53, %c0_22] : memref<64x512xf32, #tpu.memory_space<vmem>>, vector<8x512xf32>
    %c0_23 = arith.constant 0 : index
    %c0_24 = arith.constant 0 : index
    %55 = vector.load %arg3[%c0_23, %c0_24] : memref<128x512xf32, #tpu.memory_space<vmem>>, vector<128x512xf32>
    %cst_25 = arith.constant dense<0.000000e+00> : vector<8x512xf32>
    %56 = tpu.matmul %43, %55, %cst_25 {dimension_numbers = #tpu.dot_dimension_numbers<[1], [0], [0], [1], [0, 0, 1, 1], [], []>} : vector<8x128xf32>, vector<128x512xf32>, vector<8x512xf32> -> vector<8x512xf32>
    %57 = arith.addf %54, %56 : vector<8x512xf32>
    %58 = vector.extract_strided_slice %57 {offsets = [0, 0], sizes = [8, 128], strides = [1, 1]} : vector<8x512xf32> to vector<8x128xf32>
    %59 = arith.negf %58 : vector<8x128xf32>
    %60 = math.exp %59 : vector<8x128xf32>
    %cst_26 = arith.constant 1.000000e+00 : f32
    %61 = vector.broadcast %cst_26 : f32 to vector<8x128xf32>
    %62 = arith.addf %61, %60 : vector<8x128xf32>
    %63 = arith.divf %61, %62 : vector<8x128xf32>
    %64 = vector.extract_strided_slice %57 {offsets = [0, 128], sizes = [8, 128], strides = [1, 1]} : vector<8x512xf32> to vector<8x128xf32>
    %65 = arith.negf %64 : vector<8x128xf32>
    %66 = math.exp %65 : vector<8x128xf32>
    %cst_27 = arith.constant 1.000000e+00 : f32
    %67 = vector.broadcast %cst_27 : f32 to vector<8x128xf32>
    %68 = arith.addf %67, %66 : vector<8x128xf32>
    %69 = arith.divf %67, %68 : vector<8x128xf32>
    %70 = vector.extract_strided_slice %57 {offsets = [0, 256], sizes = [8, 128], strides = [1, 1]} : vector<8x512xf32> to vector<8x128xf32>
    %71 = math.tanh %70 : vector<8x128xf32>
    %72 = vector.extract_strided_slice %57 {offsets = [0, 384], sizes = [8, 128], strides = [1, 1]} : vector<8x512xf32> to vector<8x128xf32>
    %73 = arith.negf %72 : vector<8x128xf32>
    %74 = math.exp %73 : vector<8x128xf32>
    %cst_28 = arith.constant 1.000000e+00 : f32
    %75 = vector.broadcast %cst_28 : f32 to vector<8x128xf32>
    %76 = arith.addf %75, %74 : vector<8x128xf32>
    %77 = arith.divf %75, %76 : vector<8x128xf32>
    %78 = arith.mulf %69, %41 : vector<8x128xf32>
    %79 = arith.mulf %63, %71 : vector<8x128xf32>
    %80 = arith.addf %78, %79 : vector<8x128xf32>
    %81 = math.tanh %80 : vector<8x128xf32>
    %82 = arith.mulf %77, %81 : vector<8x128xf32>
    %83 = arith.index_cast %49 : i32 to index
    %c0_29 = arith.constant 0 : index
    %84 = vector.load %arg8[%83, %c0_29] : memref<64x128xf32, #tpu.memory_space<vmem>>, vector<8x128xf32>
    tpu.vector_store %arg8[%83, %c0_29], %82 {strides = array<i32>} : memref<64x128xf32, #tpu.memory_space<vmem>>, vector<8x128xf32>,
    %85 = arith.index_cast %52 : i32 to index
    %c0_30 = arith.constant 0 : index
    %86 = vector.load %arg9[%85, %c0_30] : memref<64x128xf32, #tpu.memory_space<vmem>>, vector<8x128xf32>
    tpu.vector_store %arg9[%85, %c0_30], %82 {strides = array<i32>} : memref<64x128xf32, #tpu.memory_space<vmem>>, vector<8x128xf32>,
    %c2_i32 = arith.constant 2 : i32
    %c8_i32_31 = arith.constant 8 : i32
    %87 = arith.muli %c2_i32, %c8_i32_31 : i32
    %88 = tpu.assume_multiple %87, 8 : i32
    %c7_i32_32 = arith.constant 7 : i32
    %89 = arith.subi %c7_i32_32, %c2_i32 : i32
    %c8_i32_33 = arith.constant 8 : i32
    %90 = arith.muli %89, %c8_i32_33 : i32
    %91 = tpu.assume_multiple %90, 8 : i32
    %92 = arith.index_cast %88 : i32 to index
    %c0_34 = arith.constant 0 : index
    %93 = vector.load %arg7[%92, %c0_34] : memref<64x512xf32, #tpu.memory_space<vmem>>, vector<8x512xf32>
    %c0_35 = arith.constant 0 : index
    %c0_36 = arith.constant 0 : index
    %94 = vector.load %arg3[%c0_35, %c0_36] : memref<128x512xf32, #tpu.memory_space<vmem>>, vector<128x512xf32>
    %cst_37 = arith.constant dense<0.000000e+00> : vector<8x512xf32>
    %95 = tpu.matmul %82, %94, %cst_37 {dimension_numbers = #tpu.dot_dimension_numbers<[1], [0], [0], [1], [0, 0, 1, 1], [], []>} : vector<8x128xf32>, vector<128x512xf32>, vector<8x512xf32> -> vector<8x512xf32>
    %96 = arith.addf %93, %95 : vector<8x512xf32>
    %97 = vector.extract_strided_slice %96 {offsets = [0, 0], sizes = [8, 128], strides = [1, 1]} : vector<8x512xf32> to vector<8x128xf32>
    %98 = arith.negf %97 : vector<8x128xf32>
    %99 = math.exp %98 : vector<8x128xf32>
    %cst_38 = arith.constant 1.000000e+00 : f32
    %100 = vector.broadcast %cst_38 : f32 to vector<8x128xf32>
    %101 = arith.addf %100, %99 : vector<8x128xf32>
    %102 = arith.divf %100, %101 : vector<8x128xf32>
    %103 = vector.extract_strided_slice %96 {offsets = [0, 128], sizes = [8, 128], strides = [1, 1]} : vector<8x512xf32> to vector<8x128xf32>
    %104 = arith.negf %103 : vector<8x128xf32>
    %105 = math.exp %104 : vector<8x128xf32>
    %cst_39 = arith.constant 1.000000e+00 : f32
    %106 = vector.broadcast %cst_39 : f32 to vector<8x128xf32>
    %107 = arith.addf %106, %105 : vector<8x128xf32>
    %108 = arith.divf %106, %107 : vector<8x128xf32>
    %109 = vector.extract_strided_slice %96 {offsets = [0, 256], sizes = [8, 128], strides = [1, 1]} : vector<8x512xf32> to vector<8x128xf32>
    %110 = math.tanh %109 : vector<8x128xf32>
    %111 = vector.extract_strided_slice %96 {offsets = [0, 384], sizes = [8, 128], strides = [1, 1]} : vector<8x512xf32> to vector<8x128xf32>
    %112 = arith.negf %111 : vector<8x128xf32>
    %113 = math.exp %112 : vector<8x128xf32>
    %cst_40 = arith.constant 1.000000e+00 : f32
    %114 = vector.broadcast %cst_40 : f32 to vector<8x128xf32>
    %115 = arith.addf %114, %113 : vector<8x128xf32>
    %116 = arith.divf %114, %115 : vector<8x128xf32>
    %117 = arith.mulf %108, %80 : vector<8x128xf32>
    %118 = arith.mulf %102, %110 : vector<8x128xf32>
    %119 = arith.addf %117, %118 : vector<8x128xf32>
    %120 = math.tanh %119 : vector<8x128xf32>
    %121 = arith.mulf %116, %120 : vector<8x128xf32>
    %122 = arith.index_cast %88 : i32 to index
    %c0_41 = arith.constant 0 : index
    %123 = vector.load %arg8[%122, %c0_41] : memref<64x128xf32, #tpu.memory_space<vmem>>, vector<8x128xf32>
    tpu.vector_store %arg8[%122, %c0_41], %121 {strides = array<i32>} : memref<64x128xf32, #tpu.memory_space<vmem>>, vector<8x128xf32>,
    %124 = arith.index_cast %91 : i32 to index
    %c0_42 = arith.constant 0 : index
    %125 = vector.load %arg9[%124, %c0_42] : memref<64x128xf32, #tpu.memory_space<vmem>>, vector<8x128xf32>
    tpu.vector_store %arg9[%124, %c0_42], %121 {strides = array<i32>} : memref<64x128xf32, #tpu.memory_space<vmem>>, vector<8x128xf32>,
    %c3_i32 = arith.constant 3 : i32
    %c8_i32_43 = arith.constant 8 : i32
    %126 = arith.muli %c3_i32, %c8_i32_43 : i32
    %127 = tpu.assume_multiple %126, 8 : i32
    %c7_i32_44 = arith.constant 7 : i32
    %128 = arith.subi %c7_i32_44, %c3_i32 : i32
    %c8_i32_45 = arith.constant 8 : i32
    %129 = arith.muli %128, %c8_i32_45 : i32
    %130 = tpu.assume_multiple %129, 8 : i32
    %131 = arith.index_cast %127 : i32 to index
    %c0_46 = arith.constant 0 : index
    %132 = vector.load %arg7[%131, %c0_46] : memref<64x512xf32, #tpu.memory_space<vmem>>, vector<8x512xf32>
    %c0_47 = arith.constant 0 : index
    %c0_48 = arith.constant 0 : index
    %133 = vector.load %arg3[%c0_47, %c0_48] : memref<128x512xf32, #tpu.memory_space<vmem>>, vector<128x512xf32>
    %cst_49 = arith.constant dense<0.000000e+00> : vector<8x512xf32>
    %134 = tpu.matmul %121, %133, %cst_49 {dimension_numbers = #tpu.dot_dimension_numbers<[1], [0], [0], [1], [0, 0, 1, 1], [], []>} : vector<8x128xf32>, vector<128x512xf32>, vector<8x512xf32> -> vector<8x512xf32>
    %135 = arith.addf %132, %134 : vector<8x512xf32>
    %136 = vector.extract_strided_slice %135 {offsets = [0, 0], sizes = [8, 128], strides = [1, 1]} : vector<8x512xf32> to vector<8x128xf32>
    %137 = arith.negf %136 : vector<8x128xf32>
    %138 = math.exp %137 : vector<8x128xf32>
    %cst_50 = arith.constant 1.000000e+00 : f32
    %139 = vector.broadcast %cst_50 : f32 to vector<8x128xf32>
    %140 = arith.addf %139, %138 : vector<8x128xf32>
    %141 = arith.divf %139, %140 : vector<8x128xf32>
    %142 = vector.extract_strided_slice %135 {offsets = [0, 128], sizes = [8, 128], strides = [1, 1]} : vector<8x512xf32> to vector<8x128xf32>
    %143 = arith.negf %142 : vector<8x128xf32>
    %144 = math.exp %143 : vector<8x128xf32>
    %cst_51 = arith.constant 1.000000e+00 : f32
    %145 = vector.broadcast %cst_51 : f32 to vector<8x128xf32>
    %146 = arith.addf %145, %144 : vector<8x128xf32>
    %147 = arith.divf %145, %146 : vector<8x128xf32>
    %148 = vector.extract_strided_slice %135 {offsets = [0, 256], sizes = [8, 128], strides = [1, 1]} : vector<8x512xf32> to vector<8x128xf32>
    %149 = math.tanh %148 : vector<8x128xf32>
    %150 = vector.extract_strided_slice %135 {offsets = [0, 384], sizes = [8, 128], strides = [1, 1]} : vector<8x512xf32> to vector<8x128xf32>
    %151 = arith.negf %150 : vector<8x128xf32>
    %152 = math.exp %151 : vector<8x128xf32>
    %cst_52 = arith.constant 1.000000e+00 : f32
    %153 = vector.broadcast %cst_52 : f32 to vector<8x128xf32>
    %154 = arith.addf %153, %152 : vector<8x128xf32>
    %155 = arith.divf %153, %154 : vector<8x128xf32>
    %156 = arith.mulf %147, %119 : vector<8x128xf32>
    %157 = arith.mulf %141, %149 : vector<8x128xf32>
    %158 = arith.addf %156, %157 : vector<8x128xf32>
    %159 = math.tanh %158 : vector<8x128xf32>
    %160 = arith.mulf %155, %159 : vector<8x128xf32>
    %161 = arith.index_cast %127 : i32 to index
    %c0_53 = arith.constant 0 : index
    %162 = vector.load %arg8[%161, %c0_53] : memref<64x128xf32, #tpu.memory_space<vmem>>, vector<8x128xf32>
    tpu.vector_store %arg8[%161, %c0_53], %160 {strides = array<i32>} : memref<64x128xf32, #tpu.memory_space<vmem>>, vector<8x128xf32>,
    %163 = arith.index_cast %130 : i32 to index
    %c0_54 = arith.constant 0 : index
    %164 = vector.load %arg9[%163, %c0_54] : memref<64x128xf32, #tpu.memory_space<vmem>>, vector<8x128xf32>
    tpu.vector_store %arg9[%163, %c0_54], %160 {strides = array<i32>} : memref<64x128xf32, #tpu.memory_space<vmem>>, vector<8x128xf32>,
    %c4_i32 = arith.constant 4 : i32
    %c8_i32_55 = arith.constant 8 : i32
    %165 = arith.muli %c4_i32, %c8_i32_55 : i32
    %166 = tpu.assume_multiple %165, 8 : i32
    %c7_i32_56 = arith.constant 7 : i32
    %167 = arith.subi %c7_i32_56, %c4_i32 : i32
    %c8_i32_57 = arith.constant 8 : i32
    %168 = arith.muli %167, %c8_i32_57 : i32
    %169 = tpu.assume_multiple %168, 8 : i32
    %170 = arith.index_cast %166 : i32 to index
    %c0_58 = arith.constant 0 : index
    %171 = vector.load %arg7[%170, %c0_58] : memref<64x512xf32, #tpu.memory_space<vmem>>, vector<8x512xf32>
    %c0_59 = arith.constant 0 : index
    %c0_60 = arith.constant 0 : index
    %172 = vector.load %arg3[%c0_59, %c0_60] : memref<128x512xf32, #tpu.memory_space<vmem>>, vector<128x512xf32>
    %cst_61 = arith.constant dense<0.000000e+00> : vector<8x512xf32>
    %173 = tpu.matmul %160, %172, %cst_61 {dimension_numbers = #tpu.dot_dimension_numbers<[1], [0], [0], [1], [0, 0, 1, 1], [], []>} : vector<8x128xf32>, vector<128x512xf32>, vector<8x512xf32> -> vector<8x512xf32>
    %174 = arith.addf %171, %173 : vector<8x512xf32>
    %175 = vector.extract_strided_slice %174 {offsets = [0, 0], sizes = [8, 128], strides = [1, 1]} : vector<8x512xf32> to vector<8x128xf32>
    %176 = arith.negf %175 : vector<8x128xf32>
    %177 = math.exp %176 : vector<8x128xf32>
    %cst_62 = arith.constant 1.000000e+00 : f32
    %178 = vector.broadcast %cst_62 : f32 to vector<8x128xf32>
    %179 = arith.addf %178, %177 : vector<8x128xf32>
    %180 = arith.divf %178, %179 : vector<8x128xf32>
    %181 = vector.extract_strided_slice %174 {offsets = [0, 128], sizes = [8, 128], strides = [1, 1]} : vector<8x512xf32> to vector<8x128xf32>
    %182 = arith.negf %181 : vector<8x128xf32>
    %183 = math.exp %182 : vector<8x128xf32>
    %cst_63 = arith.constant 1.000000e+00 : f32
    %184 = vector.broadcast %cst_63 : f32 to vector<8x128xf32>
    %185 = arith.addf %184, %183 : vector<8x128xf32>
    %186 = arith.divf %184, %185 : vector<8x128xf32>
    %187 = vector.extract_strided_slice %174 {offsets = [0, 256], sizes = [8, 128], strides = [1, 1]} : vector<8x512xf32> to vector<8x128xf32>
    %188 = math.tanh %187 : vector<8x128xf32>
    %189 = vector.extract_strided_slice %174 {offsets = [0, 384], sizes = [8, 128], strides = [1, 1]} : vector<8x512xf32> to vector<8x128xf32>
    %190 = arith.negf %189 : vector<8x128xf32>
    %191 = math.exp %190 : vector<8x128xf32>
    %cst_64 = arith.constant 1.000000e+00 : f32
    %192 = vector.broadcast %cst_64 : f32 to vector<8x128xf32>
    %193 = arith.addf %192, %191 : vector<8x128xf32>
    %194 = arith.divf %192, %193 : vector<8x128xf32>
    %195 = arith.mulf %186, %158 : vector<8x128xf32>
    %196 = arith.mulf %180, %188 : vector<8x128xf32>
    %197 = arith.addf %195, %196 : vector<8x128xf32>
    %198 = math.tanh %197 : vector<8x128xf32>
    %199 = arith.mulf %194, %198 : vector<8x128xf32>
    %200 = arith.index_cast %166 : i32 to index
    %c0_65 = arith.constant 0 : index
    %201 = vector.load %arg8[%200, %c0_65] : memref<64x128xf32, #tpu.memory_space<vmem>>, vector<8x128xf32>
    tpu.vector_store %arg8[%200, %c0_65], %199 {strides = array<i32>} : memref<64x128xf32, #tpu.memory_space<vmem>>, vector<8x128xf32>,
    %202 = arith.index_cast %169 : i32 to index
    %c0_66 = arith.constant 0 : index
    %203 = vector.load %arg9[%202, %c0_66] : memref<64x128xf32, #tpu.memory_space<vmem>>, vector<8x128xf32>
    tpu.vector_store %arg9[%202, %c0_66], %199 {strides = array<i32>} : memref<64x128xf32, #tpu.memory_space<vmem>>, vector<8x128xf32>,
    %c5_i32 = arith.constant 5 : i32
    %c8_i32_67 = arith.constant 8 : i32
    %204 = arith.muli %c5_i32, %c8_i32_67 : i32
    %205 = tpu.assume_multiple %204, 8 : i32
    %c7_i32_68 = arith.constant 7 : i32
    %206 = arith.subi %c7_i32_68, %c5_i32 : i32
    %c8_i32_69 = arith.constant 8 : i32
    %207 = arith.muli %206, %c8_i32_69 : i32
    %208 = tpu.assume_multiple %207, 8 : i32
    %209 = arith.index_cast %205 : i32 to index
    %c0_70 = arith.constant 0 : index
    %210 = vector.load %arg7[%209, %c0_70] : memref<64x512xf32, #tpu.memory_space<vmem>>, vector<8x512xf32>
    %c0_71 = arith.constant 0 : index
    %c0_72 = arith.constant 0 : index
    %211 = vector.load %arg3[%c0_71, %c0_72] : memref<128x512xf32, #tpu.memory_space<vmem>>, vector<128x512xf32>
    %cst_73 = arith.constant dense<0.000000e+00> : vector<8x512xf32>
    %212 = tpu.matmul %199, %211, %cst_73 {dimension_numbers = #tpu.dot_dimension_numbers<[1], [0], [0], [1], [0, 0, 1, 1], [], []>} : vector<8x128xf32>, vector<128x512xf32>, vector<8x512xf32> -> vector<8x512xf32>
    %213 = arith.addf %210, %212 : vector<8x512xf32>
    %214 = vector.extract_strided_slice %213 {offsets = [0, 0], sizes = [8, 128], strides = [1, 1]} : vector<8x512xf32> to vector<8x128xf32>
    %215 = arith.negf %214 : vector<8x128xf32>
    %216 = math.exp %215 : vector<8x128xf32>
    %cst_74 = arith.constant 1.000000e+00 : f32
    %217 = vector.broadcast %cst_74 : f32 to vector<8x128xf32>
    %218 = arith.addf %217, %216 : vector<8x128xf32>
    %219 = arith.divf %217, %218 : vector<8x128xf32>
    %220 = vector.extract_strided_slice %213 {offsets = [0, 128], sizes = [8, 128], strides = [1, 1]} : vector<8x512xf32> to vector<8x128xf32>
    %221 = arith.negf %220 : vector<8x128xf32>
    %222 = math.exp %221 : vector<8x128xf32>
    %cst_75 = arith.constant 1.000000e+00 : f32
    %223 = vector.broadcast %cst_75 : f32 to vector<8x128xf32>
    %224 = arith.addf %223, %222 : vector<8x128xf32>
    %225 = arith.divf %223, %224 : vector<8x128xf32>
    %226 = vector.extract_strided_slice %213 {offsets = [0, 256], sizes = [8, 128], strides = [1, 1]} : vector<8x512xf32> to vector<8x128xf32>
    %227 = math.tanh %226 : vector<8x128xf32>
    %228 = vector.extract_strided_slice %213 {offsets = [0, 384], sizes = [8, 128], strides = [1, 1]} : vector<8x512xf32> to vector<8x128xf32>
    %229 = arith.negf %228 : vector<8x128xf32>
    %230 = math.exp %229 : vector<8x128xf32>
    %cst_76 = arith.constant 1.000000e+00 : f32
    %231 = vector.broadcast %cst_76 : f32 to vector<8x128xf32>
    %232 = arith.addf %231, %230 : vector<8x128xf32>
    %233 = arith.divf %231, %232 : vector<8x128xf32>
    %234 = arith.mulf %225, %197 : vector<8x128xf32>
    %235 = arith.mulf %219, %227 : vector<8x128xf32>
    %236 = arith.addf %234, %235 : vector<8x128xf32>
    %237 = math.tanh %236 : vector<8x128xf32>
    %238 = arith.mulf %233, %237 : vector<8x128xf32>
    %239 = arith.index_cast %205 : i32 to index
    %c0_77 = arith.constant 0 : index
    %240 = vector.load %arg8[%239, %c0_77] : memref<64x128xf32, #tpu.memory_space<vmem>>, vector<8x128xf32>
    tpu.vector_store %arg8[%239, %c0_77], %238 {strides = array<i32>} : memref<64x128xf32, #tpu.memory_space<vmem>>, vector<8x128xf32>,
    %241 = arith.index_cast %208 : i32 to index
    %c0_78 = arith.constant 0 : index
    %242 = vector.load %arg9[%241, %c0_78] : memref<64x128xf32, #tpu.memory_space<vmem>>, vector<8x128xf32>
    tpu.vector_store %arg9[%241, %c0_78], %238 {strides = array<i32>} : memref<64x128xf32, #tpu.memory_space<vmem>>, vector<8x128xf32>,
    %c6_i32 = arith.constant 6 : i32
    %c8_i32_79 = arith.constant 8 : i32
    %243 = arith.muli %c6_i32, %c8_i32_79 : i32
    %244 = tpu.assume_multiple %243, 8 : i32
    %c7_i32_80 = arith.constant 7 : i32
    %245 = arith.subi %c7_i32_80, %c6_i32 : i32
    %c8_i32_81 = arith.constant 8 : i32
    %246 = arith.muli %245, %c8_i32_81 : i32
    %247 = tpu.assume_multiple %246, 8 : i32
    %248 = arith.index_cast %244 : i32 to index
    %c0_82 = arith.constant 0 : index
    %249 = vector.load %arg7[%248, %c0_82] : memref<64x512xf32, #tpu.memory_space<vmem>>, vector<8x512xf32>
    %c0_83 = arith.constant 0 : index
    %c0_84 = arith.constant 0 : index
    %250 = vector.load %arg3[%c0_83, %c0_84] : memref<128x512xf32, #tpu.memory_space<vmem>>, vector<128x512xf32>
    %cst_85 = arith.constant dense<0.000000e+00> : vector<8x512xf32>
    %251 = tpu.matmul %238, %250, %cst_85 {dimension_numbers = #tpu.dot_dimension_numbers<[1], [0], [0], [1], [0, 0, 1, 1], [], []>} : vector<8x128xf32>, vector<128x512xf32>, vector<8x512xf32> -> vector<8x512xf32>
    %252 = arith.addf %249, %251 : vector<8x512xf32>
    %253 = vector.extract_strided_slice %252 {offsets = [0, 0], sizes = [8, 128], strides = [1, 1]} : vector<8x512xf32> to vector<8x128xf32>
    %254 = arith.negf %253 : vector<8x128xf32>
    %255 = math.exp %254 : vector<8x128xf32>
    %cst_86 = arith.constant 1.000000e+00 : f32
    %256 = vector.broadcast %cst_86 : f32 to vector<8x128xf32>
    %257 = arith.addf %256, %255 : vector<8x128xf32>
    %258 = arith.divf %256, %257 : vector<8x128xf32>
    %259 = vector.extract_strided_slice %252 {offsets = [0, 128], sizes = [8, 128], strides = [1, 1]} : vector<8x512xf32> to vector<8x128xf32>
    %260 = arith.negf %259 : vector<8x128xf32>
    %261 = math.exp %260 : vector<8x128xf32>
    %cst_87 = arith.constant 1.000000e+00 : f32
    %262 = vector.broadcast %cst_87 : f32 to vector<8x128xf32>
    %263 = arith.addf %262, %261 : vector<8x128xf32>
    %264 = arith.divf %262, %263 : vector<8x128xf32>
    %265 = vector.extract_strided_slice %252 {offsets = [0, 256], sizes = [8, 128], strides = [1, 1]} : vector<8x512xf32> to vector<8x128xf32>
    %266 = math.tanh %265 : vector<8x128xf32>
    %267 = vector.extract_strided_slice %252 {offsets = [0, 384], sizes = [8, 128], strides = [1, 1]} : vector<8x512xf32> to vector<8x128xf32>
    %268 = arith.negf %267 : vector<8x128xf32>
    %269 = math.exp %268 : vector<8x128xf32>
    %cst_88 = arith.constant 1.000000e+00 : f32
    %270 = vector.broadcast %cst_88 : f32 to vector<8x128xf32>
    %271 = arith.addf %270, %269 : vector<8x128xf32>
    %272 = arith.divf %270, %271 : vector<8x128xf32>
    %273 = arith.mulf %264, %236 : vector<8x128xf32>
    %274 = arith.mulf %258, %266 : vector<8x128xf32>
    %275 = arith.addf %273, %274 : vector<8x128xf32>
    %276 = math.tanh %275 : vector<8x128xf32>
    %277 = arith.mulf %272, %276 : vector<8x128xf32>
    %278 = arith.index_cast %244 : i32 to index
    %c0_89 = arith.constant 0 : index
    %279 = vector.load %arg8[%278, %c0_89] : memref<64x128xf32, #tpu.memory_space<vmem>>, vector<8x128xf32>
    tpu.vector_store %arg8[%278, %c0_89], %277 {strides = array<i32>} : memref<64x128xf32, #tpu.memory_space<vmem>>, vector<8x128xf32>,
    %280 = arith.index_cast %247 : i32 to index
    %c0_90 = arith.constant 0 : index
    %281 = vector.load %arg9[%280, %c0_90] : memref<64x128xf32, #tpu.memory_space<vmem>>, vector<8x128xf32>
    tpu.vector_store %arg9[%280, %c0_90], %277 {strides = array<i32>} : memref<64x128xf32, #tpu.memory_space<vmem>>, vector<8x128xf32>,
    %c7_i32_91 = arith.constant 7 : i32
    %c8_i32_92 = arith.constant 8 : i32
    %282 = arith.muli %c7_i32_91, %c8_i32_92 : i32
    %283 = tpu.assume_multiple %282, 8 : i32
    %c7_i32_93 = arith.constant 7 : i32
    %284 = arith.subi %c7_i32_93, %c7_i32_91 : i32
    %c8_i32_94 = arith.constant 8 : i32
    %285 = arith.muli %284, %c8_i32_94 : i32
    %286 = tpu.assume_multiple %285, 8 : i32
    %287 = arith.index_cast %283 : i32 to index
    %c0_95 = arith.constant 0 : index
    %288 = vector.load %arg7[%287, %c0_95] : memref<64x512xf32, #tpu.memory_space<vmem>>, vector<8x512xf32>
    %c0_96 = arith.constant 0 : index
    %c0_97 = arith.constant 0 : index
    %289 = vector.load %arg3[%c0_96, %c0_97] : memref<128x512xf32, #tpu.memory_space<vmem>>, vector<128x512xf32>
    %cst_98 = arith.constant dense<0.000000e+00> : vector<8x512xf32>
    %290 = tpu.matmul %277, %289, %cst_98 {dimension_numbers = #tpu.dot_dimension_numbers<[1], [0], [0], [1], [0, 0, 1, 1], [], []>} : vector<8x128xf32>, vector<128x512xf32>, vector<8x512xf32> -> vector<8x512xf32>
    %291 = arith.addf %288, %290 : vector<8x512xf32>
    %292 = vector.extract_strided_slice %291 {offsets = [0, 0], sizes = [8, 128], strides = [1, 1]} : vector<8x512xf32> to vector<8x128xf32>
    %293 = arith.negf %292 : vector<8x128xf32>
    %294 = math.exp %293 : vector<8x128xf32>
    %cst_99 = arith.constant 1.000000e+00 : f32
    %295 = vector.broadcast %cst_99 : f32 to vector<8x128xf32>
    %296 = arith.addf %295, %294 : vector<8x128xf32>
    %297 = arith.divf %295, %296 : vector<8x128xf32>
    %298 = vector.extract_strided_slice %291 {offsets = [0, 128], sizes = [8, 128], strides = [1, 1]} : vector<8x512xf32> to vector<8x128xf32>
    %299 = arith.negf %298 : vector<8x128xf32>
    %300 = math.exp %299 : vector<8x128xf32>
    %cst_100 = arith.constant 1.000000e+00 : f32
    %301 = vector.broadcast %cst_100 : f32 to vector<8x128xf32>
    %302 = arith.addf %301, %300 : vector<8x128xf32>
    %303 = arith.divf %301, %302 : vector<8x128xf32>
    %304 = vector.extract_strided_slice %291 {offsets = [0, 256], sizes = [8, 128], strides = [1, 1]} : vector<8x512xf32> to vector<8x128xf32>
    %305 = math.tanh %304 : vector<8x128xf32>
    %306 = vector.extract_strided_slice %291 {offsets = [0, 384], sizes = [8, 128], strides = [1, 1]} : vector<8x512xf32> to vector<8x128xf32>
    %307 = arith.negf %306 : vector<8x128xf32>
    %308 = math.exp %307 : vector<8x128xf32>
    %cst_101 = arith.constant 1.000000e+00 : f32
    %309 = vector.broadcast %cst_101 : f32 to vector<8x128xf32>
    %310 = arith.addf %309, %308 : vector<8x128xf32>
    %311 = arith.divf %309, %310 : vector<8x128xf32>
    %312 = arith.mulf %303, %275 : vector<8x128xf32>
    %313 = arith.mulf %297, %305 : vector<8x128xf32>
    %314 = arith.addf %312, %313 : vector<8x128xf32>
    %315 = math.tanh %314 : vector<8x128xf32>
    %316 = arith.mulf %311, %315 : vector<8x128xf32>
    %317 = arith.index_cast %283 : i32 to index
    %c0_102 = arith.constant 0 : index
    %318 = vector.load %arg8[%317, %c0_102] : memref<64x128xf32, #tpu.memory_space<vmem>>, vector<8x128xf32>
    tpu.vector_store %arg8[%317, %c0_102], %316 {strides = array<i32>} : memref<64x128xf32, #tpu.memory_space<vmem>>, vector<8x128xf32>,
    %319 = arith.index_cast %286 : i32 to index
    %c0_103 = arith.constant 0 : index
    %320 = vector.load %arg9[%319, %c0_103] : memref<64x128xf32, #tpu.memory_space<vmem>>, vector<8x128xf32>
    tpu.vector_store %arg9[%319, %c0_103], %316 {strides = array<i32>} : memref<64x128xf32, #tpu.memory_space<vmem>>, vector<8x128xf32>,
    %c8_i32_104 = arith.constant 8 : i32
    %c0_105 = arith.constant 0 : index
    %c0_106 = arith.constant 0 : index
    %321 = vector.load %arg8[%c0_105, %c0_106] : memref<64x128xf32, #tpu.memory_space<vmem>>, vector<64x128xf32>
    %c0_107 = arith.constant 0 : index
    %c0_108 = arith.constant 0 : index
    %322 = vector.load %arg4[%c0_107, %c0_108] : memref<256x128xf32, #tpu.memory_space<vmem>>, vector<128x128xf32>
    %cst_109 = arith.constant dense<0.000000e+00> : vector<64x128xf32>
    %323 = tpu.matmul %321, %322, %cst_109 {dimension_numbers = #tpu.dot_dimension_numbers<[1], [0], [0], [1], [0, 0, 1, 1], [], []>} : vector<64x128xf32>, vector<128x128xf32>, vector<64x128xf32> -> vector<64x128xf32>
    %c0_110 = arith.constant 0 : index
    %c0_111 = arith.constant 0 : index
    %324 = vector.load %arg9[%c0_110, %c0_111] : memref<64x128xf32, #tpu.memory_space<vmem>>, vector<64x128xf32>
    %c128 = arith.constant 128 : index
    %c0_112 = arith.constant 0 : index
    %325 = vector.load %arg4[%c128, %c0_112] : memref<256x128xf32, #tpu.memory_space<vmem>>, vector<128x128xf32>
    %cst_113 = arith.constant dense<0.000000e+00> : vector<64x128xf32>
    %326 = tpu.matmul %324, %325, %cst_113 {dimension_numbers = #tpu.dot_dimension_numbers<[1], [0], [0], [1], [0, 0, 1, 1], [], []>} : vector<64x128xf32>, vector<128x128xf32>, vector<64x128xf32> -> vector<64x128xf32>
    %327 = arith.addf %323, %326 : vector<64x128xf32>
    %c0_114 = arith.constant 0 : index
    %c0_115 = arith.constant 0 : index
    %328 = vector.load %arg5[%c0_114, %c0_115] : memref<1x128xf32, #tpu.memory_space<vmem>>, vector<1x128xf32>
    %329 = vector.broadcast %328 : vector<1x128xf32> to vector<64x128xf32>
    %330 = arith.addf %327, %329 : vector<64x128xf32>
    %c0_116 = arith.constant 0 : index
    %c0_117 = arith.constant 0 : index
    %331 = vector.load %arg6[%c0_116, %c0_117] : memref<64x128xf32, #tpu.memory_space<vmem>>, vector<64x128xf32>
    tpu.vector_store %arg6[%c0_116, %c0_117], %330 {strides = array<i32>} : memref<64x128xf32, #tpu.memory_space<vmem>>, vector<64x128xf32>,
    return
  }
}

</mosaic_0001>

<llo_original>
// kernel: bilstm_forward.1
$region0: #{bilstm_forward.1}
  #allocation0 [shape = 'u32[]', space=smem, size = 0x4, offset = 0x4, fixed_abs, tag = 'smem constant byte address 0x4 - core index']
  #allocation1 [shape = 'u32[72,128]{1,0:T(1,128)}', space=vmem, size = 0x9000, scoped, tag = 'internal scratch']
  #allocation2 [shape = 'f32[64,512]{1,0:T(8,128)}', space=vmem, size = 0x20000, scoped, tag = 'scratch operand']
  #allocation3 [shape = 'f32[64,128]{1,0:T(8,128)}', space=vmem, size = 0x8000, scoped, tag = 'scratch operand']
  #allocation4 [shape = 'f32[64,128]{1,0:T(8,128)}', space=vmem, size = 0x8000, scoped, tag = 'scratch operand']
  %s0 = inlined_call_operand.vmem [shape: f32[64,64], index: 0, kind: input, shape index: {}]
  %s1 = inlined_call_operand.hbm [shape: f32[64,512], index: 1, kind: input, shape index: {}]
  %s2 = inlined_call_operand.vmem [shape: f32[1,512], index: 2, kind: input, shape index: {}]
  %s3 = inlined_call_operand.vmem [shape: f32[128,512], index: 3, kind: input, shape index: {}]
  %s4 = inlined_call_operand.hbm [shape: f32[256,128], index: 4, kind: input, shape index: {}]
  %s5 = inlined_call_operand.vmem [shape: f32[1,128], index: 5, kind: input, shape index: {}]
  %s6 = inlined_call_operand.vmem [shape: f32[64,128], index: 6, kind: output, shape index: {}]
  %s7 = sld [smem:[#allocation0]]
  $region42: #{bilstm_forward.1} parent=0
    _
  %s9 = ssub.s32 1, %s7
  %s10 = scalar_select 0, %s9, %s7
  $region1: #{bilstm_forward.1} parent=0
    #allocation5 [shape = 'u8[131072]{0}', space=vmem, size = 0x20000, scoped, tag = 'input window, operand 1, single buffered']
    #allocation6 [shape = 's32[1]{0}', space=sflag, size = 0x4, scoped, tag = 'scoped memory for bilstm_forward.1']
    #allocation7 [shape = 'u8[131072]{0}', space=vmem, size = 0x20000, scoped, tag = 'input window, operand 4, single buffered']
    #allocation8 [shape = 's32[1]{0}', space=sflag, size = 0x4, scoped, tag = 'scoped memory for bilstm_forward.1']
    %11 = vsyncpa [#allocation6], 0
    %12 = vsyncpa [#allocation8], 0
    // Predicated region
    $region2: #{bilstm_forward.1} parent=1 // pred_check
      _
    $region3: #{bilstm_forward.1} parent=1 // pred_check_branch
      %14 = sbr.rel (0) target = $region5
    $region4: #{bilstm_forward.1} parent=1 // pred_region
      _
    $region5: #{bilstm_forward.1} parent=1 // pred_fallthru
      _
    // Predicated region
    $region6: #{bilstm_forward.1} parent=1 // pred_check
      _
    $region7: #{bilstm_forward.1} parent=1 // pred_check_branch
      %16 = sbr.rel (0) target = $region9
    $region8: #{bilstm_forward.1} parent=1 // pred_region
      %18 = vsyncadd [#allocation6], 0
      %s19 = sshll.u32 %s1, 4
      %s20 = int_to_ptr.hbm [resolvable:$true] %s19
      %s21 = sshll.u32 [#allocation5], 4
      %s22 = int_to_ptr.vmem [resolvable:$true] %s21
      %27 = dma.hbm_to_vmem [thread:$0]  %s20, 4096, %s22, [#allocation6], 512, 512, 32
    $region9: #{bilstm_forward.1} parent=1 // pred_fallthru
      _
    // Predicated region
    $region10: #{bilstm_forward.1} parent=1 // pred_check
      _
    $region11: #{bilstm_forward.1} parent=1 // pred_check_branch
      %29 = sbr.rel (0) target = $region13
    $region12: #{bilstm_forward.1} parent=1 // pred_region
      _
    $region13: #{bilstm_forward.1} parent=1 // pred_fallthru
      _
    // Predicated region
    $region14: #{bilstm_forward.1} parent=1 // pred_check
      _
    $region15: #{bilstm_forward.1} parent=1 // pred_check_branch
      %31 = sbr.rel (0) target = $region17
    $region16: #{bilstm_forward.1} parent=1 // pred_region
      _
    $region17: #{bilstm_forward.1} parent=1 // pred_fallthru
      _
    // Predicated region
    $region18: #{bilstm_forward.1} parent=1 // pred_check
      _
    $region19: #{bilstm_forward.1} parent=1 // pred_check_branch
      %33 = sbr.rel (0) target = $region21
    $region20: #{bilstm_forward.1} parent=1 // pred_region
      %35 = vsyncadd [#allocation8], 0
      %s36 = sshll.u32 %s4, 4
      %s37 = int_to_ptr.hbm [resolvable:$true] %s36
      %s38 = sshll.u32 [#allocation7], 4
      %s39 = int_to_ptr.vmem [resolvable:$true] %s38
      %44 = dma.hbm_to_vmem [thread:$0]  %s37, 4096, %s39, [#allocation8], 128, 128, 8
    $region21: #{bilstm_forward.1} parent=1 // pred_fallthru
      _
    // Predicated region
    $region22: #{bilstm_forward.1} parent=1 // pred_check
      _
    $region23: #{bilstm_forward.1} parent=1 // pred_check_branch
      %46 = sbr.rel (0) target = $region25
    $region24: #{bilstm_forward.1} parent=1 // pred_region
      _
    $region25: #{bilstm_forward.1} parent=1 // pred_fallthru
      _
    // Predicated region
    $region26: #{bilstm_forward.1} parent=1 // pred_check
      _
    $region27: #{bilstm_forward.1} parent=1 // pred_check_branch
      %48 = sbr.rel (0) target = $region29
    $region28: #{bilstm_forward.1} parent=1 // pred_region
      %50 = dma.done [#allocation6], 4096
    $region29: #{bilstm_forward.1} parent=1 // pred_fallthru
      _
    // Predicated region
    $region30: #{bilstm_forward.1} parent=1 // pred_check
      _
    $region31: #{bilstm_forward.1} parent=1 // pred_check_branch
      %52 = sbr.rel (0) target = $region33
    $region32: #{bilstm_forward.1} parent=1 // pred_region
      %54 = dma.done [#allocation8], 4096
    $region33: #{bilstm_forward.1} parent=1 // pred_fallthru
      _
    %v55 = vld [vmem:[%s0] sm:$0xff]
    %v56 = vld [vmem:[%s0 + $0x8] sm:$0xff]
    %v57 = vld [vmem:[%s0 + $0x10] sm:$0xff]
    %v58 = vld [vmem:[%s0 + $0x18] sm:$0xff]
    %v59 = vld [vmem:[%s0 + $0x20] sm:$0xff]
    %v60 = vld [vmem:[%s0 + $0x28] sm:$0xff]
    %v61 = vld [vmem:[%s0 + $0x30] sm:$0xff]
    %v62 = vld [vmem:[%s0 + $0x38] sm:$0xff]
    %v63 = vld [vmem:[#allocation5] sm:$0xff]
    %v64 = vld [vmem:[#allocation5 + $0x8] sm:$0xff]
    %v65 = vld [vmem:[#allocation5 + $0x10] sm:$0xff]
    %v66 = vld [vmem:[#allocation5 + $0x18] sm:$0xff]
    %v67 = vld [vmem:[#allocation5 + $0x20] sm:$0xff]
    %v68 = vld [vmem:[#allocation5 + $0x28] sm:$0xff]
    %v69 = vld [vmem:[#allocation5 + $0x30] sm:$0xff]
    %v70 = vld [vmem:[#allocation5 + $0x38] sm:$0xff]
    %v71 = vld [vmem:[#allocation5 + $0x40] sm:$0xff]
    %v72 = vld [vmem:[#allocation5 + $0x48] sm:$0xff]
    %v73 = vld [vmem:[#allocation5 + $0x50] sm:$0xff]
    %v74 = vld [vmem:[#allocation5 + $0x58] sm:$0xff]
    %v75 = vld [vmem:[#allocation5 + $0x60] sm:$0xff]
    %v76 = vld [vmem:[#allocation5 + $0x68] sm:$0xff]
    %v77 = vld [vmem:[#allocation5 + $0x70] sm:$0xff]
    %v78 = vld [vmem:[#allocation5 + $0x78] sm:$0xff]
    %v79 = vld [vmem:[#allocation5 + $0x80] sm:$0xff]
    %v80 = vld [vmem:[#allocation5 + $0x88] sm:$0xff]
    %v81 = vld [vmem:[#allocation5 + $0x90] sm:$0xff]
    %v82 = vld [vmem:[#allocation5 + $0x98] sm:$0xff]
    %v83 = vld [vmem:[#allocation5 + $0xa0] sm:$0xff]
    %v84 = vld [vmem:[#allocation5 + $0xa8] sm:$0xff]
    %v85 = vld [vmem:[#allocation5 + $0xb0] sm:$0xff]
    %v86 = vld [vmem:[#allocation5 + $0xb8] sm:$0xff]
    %v87 = vld [vmem:[#allocation5 + $0xc0] sm:$0xff]
    %v88 = vld [vmem:[#allocation5 + $0xc8] sm:$0xff]
    %v89 = vld [vmem:[#allocation5 + $0xd0] sm:$0xff]
    %v90 = vld [vmem:[#allocation5 + $0xd8] sm:$0xff]
    %v91 = vld [vmem:[#allocation5 + $0xe0] sm:$0xff]
    %v92 = vld [vmem:[#allocation5 + $0xe8] sm:$0xff]
    %v93 = vld [vmem:[#allocation5 + $0xf0] sm:$0xff]
    %v94 = vld [vmem:[#allocation5 + $0xf8] sm:$0xff]
    %v95 = vld [vmem:[%s2] sm:$0xf]
    %v97 = vperm.slane %v95, 0
    %v98 = vperm.slane %v95, 1
    %v99 = vperm.slane %v95, 2
    %v100 = vperm.slane %v95, 3
    %vm105 = vcmask 523264
    %v107 = vsel %vm105, %v55, 0
    %v110 = vsel %vm105, %v56, 0
    %v113 = vsel %vm105, %v57, 0
    %v116 = vsel %vm105, %v58, 0
    %v119 = vsel %vm105, %v59, 0
    %v122 = vsel %vm105, %v60, 0
    %v125 = vsel %vm105, %v61, 0
    %v128 = vsel %vm105, %v62, 0
    %130 = vmatpush.msra.mxu0 0.0
    %131 = vmatpush.msra.mxu0 0.0
    %132 = vmatpush.msra.mxu0 0.0
    %133 = vmatpush.msra.mxu0 0.0
    %134 = vmatpush.msra.mxu0 0.0
    %135 = vmatpush.msra.mxu0 0.0
    %136 = vmatpush.msra.mxu0 0.0
    %137 = vmatpush.msra.mxu0 0.0
    %138 = vmatpush.msra.mxu0 %v91
    %139 = vmatpush.msra.mxu0 %v87
    %140 = vmatpush.msra.mxu0 %v83
    %141 = vmatpush.msra.mxu0 %v79
    %142 = vmatpush.msra.mxu0 %v75
    %143 = vmatpush.msra.mxu0 %v71
    %144 = vmatpush.msra.mxu0 %v67
    %145 = vmatpush.msra.mxu0 %v63
    %146 = vmatmul.f32.gmra.mxu0 %v107
    %v147 = vpop.f32.mrf.mxu0
    %v148 = vadd.f32 %v97, %v147
    %149 = vmatmul.f32.gmra.mxu0 %v110
    %v150 = vpop.f32.mrf.mxu0
    %v151 = vadd.f32 %v97, %v150
    %152 = vmatmul.f32.gmra.mxu0 %v113
    %v153 = vpop.f32.mrf.mxu0
    %v154 = vadd.f32 %v97, %v153
    %155 = vmatmul.f32.gmra.mxu0 %v116
    %v156 = vpop.f32.mrf.mxu0
    %v157 = vadd.f32 %v97, %v156
    %158 = vmatmul.f32.gmra.mxu0 %v119
    %v159 = vpop.f32.mrf.mxu0
    %v160 = vadd.f32 %v97, %v159
    %161 = vmatmul.f32.gmra.mxu0 %v122
    %v162 = vpop.f32.mrf.mxu0
    %v163 = vadd.f32 %v97, %v162
    %164 = vmatmul.f32.gmra.mxu0 %v125
    %v165 = vpop.f32.mrf.mxu0
    %v166 = vadd.f32 %v97, %v165
    %167 = vmatmul.f32.gmra.mxu0 %v128
    %v168 = vpop.f32.mrf.mxu0
    %v169 = vadd.f32 %v97, %v168
    %170 = vdwg.mxu0
    %171 = vmatpush.msra.mxu0 0.0
    %172 = vmatpush.msra.mxu0 0.0
    %173 = vmatpush.msra.mxu0 0.0
    %174 = vmatpush.msra.mxu0 0.0
    %175 = vmatpush.msra.mxu0 0.0
    %176 = vmatpush.msra.mxu0 0.0
    %177 = vmatpush.msra.mxu0 0.0
    %178 = vmatpush.msra.mxu0 0.0
    %179 = vmatpush.msra.mxu0 %v92
    %180 = vmatpush.msra.mxu0 %v88
    %181 = vmatpush.msra.mxu0 %v84
    %182 = vmatpush.msra.mxu0 %v80
    %183 = vmatpush.msra.mxu0 %v76
    %184 = vmatpush.msra.mxu0 %v72
    %185 = vmatpush.msra.mxu0 %v68
    %186 = vmatpush.msra.mxu0 %v64
    %187 = vmatmul.f32.gmra.mxu0 %v107
    %v188 = vpop.f32.mrf.mxu0
    %v189 = vadd.f32 %v98, %v188
    %190 = vmatmul.f32.gmra.mxu0 %v110
    %v191 = vpop.f32.mrf.mxu0
    %v192 = vadd.f32 %v98, %v191
    %193 = vmatmul.f32.gmra.mxu0 %v113
    %v194 = vpop.f32.mrf.mxu0
    %v195 = vadd.f32 %v98, %v194
    %196 = vmatmul.f32.gmra.mxu0 %v116
    %v197 = vpop.f32.mrf.mxu0
    %v198 = vadd.f32 %v98, %v197
    %199 = vmatmul.f32.gmra.mxu0 %v119
    %v200 = vpop.f32.mrf.mxu0
    %v201 = vadd.f32 %v98, %v200
    %202 = vmatmul.f32.gmra.mxu0 %v122
    %v203 = vpop.f32.mrf.mxu0
    %v204 = vadd.f32 %v98, %v203
    %205 = vmatmul.f32.gmra.mxu0 %v125
    %v206 = vpop.f32.mrf.mxu0
    %v207 = vadd.f32 %v98, %v206
    %208 = vmatmul.f32.gmra.mxu0 %v128
    %v209 = vpop.f32.mrf.mxu0
    %v210 = vadd.f32 %v98, %v209
    %211 = vdwg.mxu0
    %212 = vmatpush.msra.mxu0 0.0
    %213 = vmatpush.msra.mxu0 0.0
    %214 = vmatpush.msra.mxu0 0.0
    %215 = vmatpush.msra.mxu0 0.0
    %216 = vmatpush.msra.mxu0 0.0
    %217 = vmatpush.msra.mxu0 0.0
    %218 = vmatpush.msra.mxu0 0.0
    %219 = vmatpush.msra.mxu0 0.0
    %220 = vmatpush.msra.mxu0 %v93
    %221 = vmatpush.msra.mxu0 %v89
    %222 = vmatpush.msra.mxu0 %v85
    %223 = vmatpush.msra.mxu0 %v81
    %224 = vmatpush.msra.mxu0 %v77
    %225 = vmatpush.msra.mxu0 %v73
    %226 = vmatpush.msra.mxu0 %v69
    %227 = vmatpush.msra.mxu0 %v65
    %228 = vmatmul.f32.gmra.mxu0 %v107
    %v229 = vpop.f32.mrf.mxu0
    %v230 = vadd.f32 %v99, %v229
    %231 = vmatmul.f32.gmra.mxu0 %v110
    %v232 = vpop.f32.mrf.mxu0
    %v233 = vadd.f32 %v99, %v232
    %234 = vmatmul.f32.gmra.mxu0 %v113
    %v235 = vpop.f32.mrf.mxu0
    %v236 = vadd.f32 %v99, %v235
    %237 = vmatmul.f32.gmra.mxu0 %v116
    %v238 = vpop.f32.mrf.mxu0
    %v239 = vadd.f32 %v99, %v238
    %240 = vmatmul.f32.gmra.mxu0 %v119
    %v241 = vpop.f32.mrf.mxu0
    %v242 = vadd.f32 %v99, %v241
    %243 = vmatmul.f32.gmra.mxu0 %v122
    %v244 = vpop.f32.mrf.mxu0
    %v245 = vadd.f32 %v99, %v244
    %246 = vmatmul.f32.gmra.mxu0 %v125
    %v247 = vpop.f32.mrf.mxu0
    %v248 = vadd.f32 %v99, %v247
    %249 = vmatmul.f32.gmra.mxu0 %v128
    %v250 = vpop.f32.mrf.mxu0
    %v251 = vadd.f32 %v99, %v250
    %252 = vdwg.mxu0
    %253 = vmatpush.msra.mxu0 0.0
    %254 = vmatpush.msra.mxu0 0.0
    %255 = vmatpush.msra.mxu0 0.0
    %256 = vmatpush.msra.mxu0 0.0
    %257 = vmatpush.msra.mxu0 0.0
    %258 = vmatpush.msra.mxu0 0.0
    %259 = vmatpush.msra.mxu0 0.0
    %260 = vmatpush.msra.mxu0 0.0
    %261 = vmatpush.msra.mxu0 %v94
    %262 = vmatpush.msra.mxu0 %v90
    %263 = vmatpush.msra.mxu0 %v86
    %264 = vmatpush.msra.mxu0 %v82
    %265 = vmatpush.msra.mxu0 %v78
    %266 = vmatpush.msra.mxu0 %v74
    %267 = vmatpush.msra.mxu0 %v70
    %268 = vmatpush.msra.mxu0 %v66
    %269 = vmatmul.f32.gmra.mxu0 %v107
    %v270 = vpop.f32.mrf.mxu0
    %v271 = vadd.f32 %v100, %v270
    %272 = vmatmul.f32.gmra.mxu0 %v110
    %v273 = vpop.f32.mrf.mxu0
    %v274 = vadd.f32 %v100, %v273
    %275 = vmatmul.f32.gmra.mxu0 %v113
    %v276 = vpop.f32.mrf.mxu0
    %v277 = vadd.f32 %v100, %v276
    %278 = vmatmul.f32.gmra.mxu0 %v116
    %v279 = vpop.f32.mrf.mxu0
    %v280 = vadd.f32 %v100, %v279
    %281 = vmatmul.f32.gmra.mxu0 %v119
    %v282 = vpop.f32.mrf.mxu0
    %v283 = vadd.f32 %v100, %v282
    %284 = vmatmul.f32.gmra.mxu0 %v122
    %v285 = vpop.f32.mrf.mxu0
    %v286 = vadd.f32 %v100, %v285
    %287 = vmatmul.f32.gmra.mxu0 %v125
    %v288 = vpop.f32.mrf.mxu0
    %v289 = vadd.f32 %v100, %v288
    %290 = vmatmul.f32.gmra.mxu0 %v128
    %v291 = vpop.f32.mrf.mxu0
    %v292 = vadd.f32 %v100, %v291
    %293 = vdwg.mxu0
    %294 = vst [vmem:[#allocation2] sm:$0xff] %v148
    %295 = vst [vmem:[#allocation2 + $0x8] sm:$0xff] %v189
    %296 = vst [vmem:[#allocation2 + $0x10] sm:$0xff] %v230
    %297 = vst [vmem:[#allocation2 + $0x18] sm:$0xff] %v271
    %298 = vst [vmem:[#allocation2 + $0x20] sm:$0xff] %v151
    %299 = vst [vmem:[#allocation2 + $0x28] sm:$0xff] %v192
    %300 = vst [vmem:[#allocation2 + $0x30] sm:$0xff] %v233
    %301 = vst [vmem:[#allocation2 + $0x38] sm:$0xff] %v274
    %302 = vst [vmem:[#allocation2 + $0x40] sm:$0xff] %v154
    %303 = vst [vmem:[#allocation2 + $0x48] sm:$0xff] %v195
    %304 = vst [vmem:[#allocation2 + $0x50] sm:$0xff] %v236
    %305 = vst [vmem:[#allocation2 + $0x58] sm:$0xff] %v277
    %306 = vst [vmem:[#allocation2 + $0x60] sm:$0xff] %v157
    %307 = vst [vmem:[#allocation2 + $0x68] sm:$0xff] %v198
    %308 = vst [vmem:[#allocation2 + $0x70] sm:$0xff] %v239
    %309 = vst [vmem:[#allocation2 + $0x78] sm:$0xff] %v280
    %310 = vst [vmem:[#allocation2 + $0x80] sm:$0xff] %v160
    %311 = vst [vmem:[#allocation2 + $0x88] sm:$0xff] %v201
    %312 = vst [vmem:[#allocation2 + $0x90] sm:$0xff] %v242
    %313 = vst [vmem:[#allocation2 + $0x98] sm:$0xff] %v283
    %314 = vst [vmem:[#allocation2 + $0xa0] sm:$0xff] %v163
    %315 = vst [vmem:[#allocation2 + $0xa8] sm:$0xff] %v204
    %316 = vst [vmem:[#allocation2 + $0xb0] sm:$0xff] %v245
    %317 = vst [vmem:[#allocation2 + $0xb8] sm:$0xff] %v286
    %318 = vst [vmem:[#allocation2 + $0xc0] sm:$0xff] %v166
    %319 = vst [vmem:[#allocation2 + $0xc8] sm:$0xff] %v207
    %320 = vst [vmem:[#allocation2 + $0xd0] sm:$0xff] %v248
    %321 = vst [vmem:[#allocation2 + $0xd8] sm:$0xff] %v289
    %322 = vst [vmem:[#allocation2 + $0xe0] sm:$0xff] %v169
    %323 = vst [vmem:[#allocation2 + $0xe8] sm:$0xff] %v210
    %324 = vst [vmem:[#allocation2 + $0xf0] sm:$0xff] %v251
    %325 = vst [vmem:[#allocation2 + $0xf8] sm:$0xff] %v292
    %s326 = smul.u32 0, 4
    %s327 = smul.addr %s326, 8
    %s328 = scalar_lea.vmem [#allocation2], %s327
    %v329 = vld [vmem:[%s328] sm:$0xff]
    %v330 = vld [vmem:[%s328 + $0x8] sm:$0xff]
    %v331 = vld [vmem:[%s328 + $0x10] sm:$0xff]
    %v332 = vld [vmem:[%s328 + $0x18] sm:$0xff]
    %v333 = vld [vmem:[%s3] sm:$0xff]
    %v334 = vld [vmem:[%s3 + $0x8] sm:$0xff]
    %v335 = vld [vmem:[%s3 + $0x10] sm:$0xff]
    %v336 = vld [vmem:[%s3 + $0x18] sm:$0xff]
    %v337 = vld [vmem:[%s3 + $0x20] sm:$0xff]
    %v338 = vld [vmem:[%s3 + $0x28] sm:$0xff]
    %v339 = vld [vmem:[%s3 + $0x30] sm:$0xff]
    %v340 = vld [vmem:[%s3 + $0x38] sm:$0xff]
    %v341 = vld [vmem:[%s3 + $0x40] sm:$0xff]
    %v342 = vld [vmem:[%s3 + $0x48] sm:$0xff]
    %v343 = vld [vmem:[%s3 + $0x50] sm:$0xff]
    %v344 = vld [vmem:[%s3 + $0x58] sm:$0xff]
    %v345 = vld [vmem:[%s3 + $0x60] sm:$0xff]
    %v346 = vld [vmem:[%s3 + $0x68] sm:$0xff]
    %v347 = vld [vmem:[%s3 + $0x70] sm:$0xff]
    %v348 = vld [vmem:[%s3 + $0x78] sm:$0xff]
    %v349 = vld [vmem:[%s3 + $0x80] sm:$0xff]
    %v350 = vld [vmem:[%s3 + $0x88] sm:$0xff]
    %v351 = vld [vmem:[%s3 + $0x90] sm:$0xff]
    %v352 = vld [vmem:[%s3 + $0x98] sm:$0xff]
    %v353 = vld [vmem:[%s3 + $0xa0] sm:$0xff]
    %v354 = vld [vmem:[%s3 + $0xa8] sm:$0xff]
    %v355 = vld [vmem:[%s3 + $0xb0] sm:$0xff]
    %v356 = vld [vmem:[%s3 + $0xb8] sm:$0xff]
    %v357 = vld [vmem:[%s3 + $0xc0] sm:$0xff]
    %v358 = vld [vmem:[%s3 + $0xc8] sm:$0xff]
    %v359 = vld [vmem:[%s3 + $0xd0] sm:$0xff]
    %v360 = vld [vmem:[%s3 + $0xd8] sm:$0xff]
    %v361 = vld [vmem:[%s3 + $0xe0] sm:$0xff]
    %v362 = vld [vmem:[%s3 + $0xe8] sm:$0xff]
    %v363 = vld [vmem:[%s3 + $0xf0] sm:$0xff]
    %v364 = vld [vmem:[%s3 + $0xf8] sm:$0xff]
    %v365 = vld [vmem:[%s3 + $0x100] sm:$0xff]
    %v366 = vld [vmem:[%s3 + $0x108] sm:$0xff]
    %v367 = vld [vmem:[%s3 + $0x110] sm:$0xff]
    %v368 = vld [vmem:[%s3 + $0x118] sm:$0xff]
    %v369 = vld [vmem:[%s3 + $0x120] sm:$0xff]
    %v370 = vld [vmem:[%s3 + $0x128] sm:$0xff]
    %v371 = vld [vmem:[%s3 + $0x130] sm:$0xff]
    %v372 = vld [vmem:[%s3 + $0x138] sm:$0xff]
    %v373 = vld [vmem:[%s3 + $0x140] sm:$0xff]
    %v374 = vld [vmem:[%s3 + $0x148] sm:$0xff]
    %v375 = vld [vmem:[%s3 + $0x150] sm:$0xff]
    %v376 = vld [vmem:[%s3 + $0x158] sm:$0xff]
    %v377 = vld [vmem:[%s3 + $0x160] sm:$0xff]
    %v378 = vld [vmem:[%s3 + $0x168] sm:$0xff]
    %v379 = vld [vmem:[%s3 + $0x170] sm:$0xff]
    %v380 = vld [vmem:[%s3 + $0x178] sm:$0xff]
    %v381 = vld [vmem:[%s3 + $0x180] sm:$0xff]
    %v382 = vld [vmem:[%s3 + $0x188] sm:$0xff]
    %v383 = vld [vmem:[%s3 + $0x190] sm:$0xff]
    %v384 = vld [vmem:[%s3 + $0x198] sm:$0xff]
    %v385 = vld [vmem:[%s3 + $0x1a0] sm:$0xff]
    %v386 = vld [vmem:[%s3 + $0x1a8] sm:$0xff]
    %v387 = vld [vmem:[%s3 + $0x1b0] sm:$0xff]
    %v388 = vld [vmem:[%s3 + $0x1b8] sm:$0xff]
    %v389 = vld [vmem:[%s3 + $0x1c0] sm:$0xff]
    %v390 = vld [vmem:[%s3 + $0x1c8] sm:$0xff]
    %v391 = vld [vmem:[%s3 + $0x1d0] sm:$0xff]
    %v392 = vld [vmem:[%s3 + $0x1d8] sm:$0xff]
    %v393 = vld [vmem:[%s3 + $0x1e0] sm:$0xff]
    %v394 = vld [vmem:[%s3 + $0x1e8] sm:$0xff]
    %v395 = vld [vmem:[%s3 + $0x1f0] sm:$0xff]
    %v396 = vld [vmem:[%s3 + $0x1f8] sm:$0xff]
    %397 = vmatpush.msra.mxu0 %v393
    %398 = vmatpush.msra.mxu0 %v389
    %399 = vmatpush.msra.mxu0 %v385
    %400 = vmatpush.msra.mxu0 %v381
    %401 = vmatpush.msra.mxu0 %v377
    %402 = vmatpush.msra.mxu0 %v373
    %403 = vmatpush.msra.mxu0 %v369
    %404 = vmatpush.msra.mxu0 %v365
    %405 = vmatpush.msra.mxu0 %v361
    %406 = vmatpush.msra.mxu0 %v357
    %407 = vmatpush.msra.mxu0 %v353
    %408 = vmatpush.msra.mxu0 %v349
    %409 = vmatpush.msra.mxu0 %v345
    %410 = vmatpush.msra.mxu0 %v341
    %411 = vmatpush.msra.mxu0 %v337
    %412 = vmatpush.msra.mxu0 %v333
    %413 = vmatmul.f32.gmra.mxu0 0.0
    %v414 = vpop.f32.mrf.mxu0
    %v415 = vadd.f32 0.0, %v414
    %416 = vdwg.mxu0
    %417 = vmatpush.msra.mxu0 %v394
    %418 = vmatpush.msra.mxu0 %v390
    %419 = vmatpush.msra.mxu0 %v386
    %420 = vmatpush.msra.mxu0 %v382
    %421 = vmatpush.msra.mxu0 %v378
    %422 = vmatpush.msra.mxu0 %v374
    %423 = vmatpush.msra.mxu0 %v370
    %424 = vmatpush.msra.mxu0 %v366
    %425 = vmatpush.msra.mxu0 %v362
    %426 = vmatpush.msra.mxu0 %v358
    %427 = vmatpush.msra.mxu0 %v354
    %428 = vmatpush.msra.mxu0 %v350
    %429 = vmatpush.msra.mxu0 %v346
    %430 = vmatpush.msra.mxu0 %v342
    %431 = vmatpush.msra.mxu0 %v338
    %432 = vmatpush.msra.mxu0 %v334
    %433 = vmatmul.f32.gmra.mxu0 0.0
    %v434 = vpop.f32.mrf.mxu0
    %v435 = vadd.f32 0.0, %v434
    %436 = vdwg.mxu0
    %437 = vmatpush.msra.mxu0 %v395
    %438 = vmatpush.msra.mxu0 %v391
    %439 = vmatpush.msra.mxu0 %v387
    %440 = vmatpush.msra.mxu0 %v383
    %441 = vmatpush.msra.mxu0 %v379
    %442 = vmatpush.msra.mxu0 %v375
    %443 = vmatpush.msra.mxu0 %v371
    %444 = vmatpush.msra.mxu0 %v367
    %445 = vmatpush.msra.mxu0 %v363
    %446 = vmatpush.msra.mxu0 %v359
    %447 = vmatpush.msra.mxu0 %v355
    %448 = vmatpush.msra.mxu0 %v351
    %449 = vmatpush.msra.mxu0 %v347
    %450 = vmatpush.msra.mxu0 %v343
    %451 = vmatpush.msra.mxu0 %v339
    %452 = vmatpush.msra.mxu0 %v335
    %453 = vmatmul.f32.gmra.mxu0 0.0
    %v454 = vpop.f32.mrf.mxu0
    %v455 = vadd.f32 0.0, %v454
    %456 = vdwg.mxu0
    %457 = vmatpush.msra.mxu0 %v396
    %458 = vmatpush.msra.mxu0 %v392
    %459 = vmatpush.msra.mxu0 %v388
    %460 = vmatpush.msra.mxu0 %v384
    %461 = vmatpush.msra.mxu0 %v380
    %462 = vmatpush.msra.mxu0 %v376
    %463 = vmatpush.msra.mxu0 %v372
    %464 = vmatpush.msra.mxu0 %v368
    %465 = vmatpush.msra.mxu0 %v364
    %466 = vmatpush.msra.mxu0 %v360
    %467 = vmatpush.msra.mxu0 %v356
    %468 = vmatpush.msra.mxu0 %v352
    %469 = vmatpush.msra.mxu0 %v348
    %470 = vmatpush.msra.mxu0 %v344
    %471 = vmatpush.msra.mxu0 %v340
    %472 = vmatpush.msra.mxu0 %v336
    %473 = vmatmul.f32.gmra.mxu0 0.0
    %v474 = vpop.f32.mrf.mxu0
    %v475 = vadd.f32 0.0, %v474
    %476 = vdwg.mxu0
    %v477 = vadd.f32 %v329, %v415
    %v478 = vadd.f32 %v330, %v435
    %v479 = vadd.f32 %v331, %v455
    %v480 = vadd.f32 %v332, %v475
    %v481 = vxor.u32 %v477, 2147483648
    %v482 = vmul.f32 %v481, 1.442695
    %v483 = vpow.pop %v482
    %v484 = vadd.f32 %v483, 1.0
    %v485 = vrcp.pop %v484
    %v486 = vmul.f32 %v484, %v485
    %v487 = vsub.f32 1.0, %v486
    %v488 = vmul.f32 %v485, %v487
    %v489 = vadd.f32 %v485, %v488
    %vm490 = vweird.f32 %v484
    %vm491 = vweird.f32 %v485
    %vm492 = vmor %vm490, %vm491
    %v493 = vsel %vm492, %v485, %v489
    %v494 = vand.u32 2147483647, %v484
    %vm495 = vcmp.eq.f32.partialorder %v494, 8.507059e+37
    %v496 = vand.u32 %v484, 2147483648
    %v497 = vor.u32 1.1754944e-38, %v496
    %v498 = vsel %vm495, %v497, %v493
    %v499 = vmul.f32 1.0, %v498
    %v500 = vxor.u32 %v478, 2147483648
    %v501 = vmul.f32 %v500, 1.442695
    %v502 = vpow.pop %v501
    %v503 = vadd.f32 %v502, 1.0
    %v504 = vrcp.pop %v503
    %v505 = vmul.f32 %v503, %v504
    %v506 = vsub.f32 1.0, %v505
    %v507 = vmul.f32 %v504, %v506
    %v508 = vadd.f32 %v504, %v507
    %vm509 = vweird.f32 %v503
    %vm510 = vweird.f32 %v504
    %vm511 = vmor %vm509, %vm510
    %v512 = vsel %vm511, %v504, %v508
    %v513 = vand.u32 2147483647, %v503
    %vm514 = vcmp.eq.f32.partialorder %v513, 8.507059e+37
    %v515 = vand.u32 %v503, 2147483648
    %v516 = vor.u32 1.1754944e-38, %v515
    %v517 = vsel %vm514, %v516, %v512
    %v518 = vmul.f32 1.0, %v517
    %v519 = vtanh.pop %v479
    %v520 = vxor.u32 %v480, 2147483648
    %v521 = vmul.f32 %v520, 1.442695
    %v522 = vpow.pop %v521
    %v523 = vadd.f32 %v522, 1.0
    %v524 = vrcp.pop %v523
    %v525 = vmul.f32 %v523, %v524
    %v526 = vsub.f32 1.0, %v525
    %v527 = vmul.f32 %v524, %v526
    %v528 = vadd.f32 %v524, %v527
    %vm529 = vweird.f32 %v523
    %vm530 = vweird.f32 %v524
    %vm531 = vmor %vm529, %vm530
    %v532 = vsel %vm531, %v524, %v528
    %v533 = vand.u32 2147483647, %v523
    %vm534 = vcmp.eq.f32.partialorder %v533, 8.507059e+37
    %v535 = vand.u32 %v523, 2147483648
    %v536 = vor.u32 1.1754944e-38, %v535
    %v537 = vsel %vm534, %v536, %v532
    %v538 = vmul.f32 1.0, %v537
    %v539 = vmul.f32 %v518, 0.0
    %v540 = vmul.f32 %v499, %v519
    %v541 = vadd.f32 %v539, %v540
    %v542 = vtanh.pop %v541
    %v543 = vmul.f32 %v538, %v542
    %544 = vst [vmem:[#allocation3] sm:$0xff] %v543
    %s545 = scalar_lea.vmem [#allocation4], 56
    %546 = vst [vmem:[%s545] sm:$0xff] %v543
    %s547 = smul.u32 1, 4
    %s548 = smul.addr %s547, 8
    %s549 = scalar_lea.vmem [#allocation2], %s548
    %v550 = vld [vmem:[%s549] sm:$0xff]
    %v551 = vld [vmem:[%s549 + $0x8] sm:$0xff]
    %v552 = vld [vmem:[%s549 + $0x10] sm:$0xff]
    %v553 = vld [vmem:[%s549 + $0x18] sm:$0xff]
    %v554 = vld [vmem:[%s3] sm:$0xff]
    %v555 = vld [vmem:[%s3 + $0x8] sm:$0xff]
    %v556 = vld [vmem:[%s3 + $0x10] sm:$0xff]
    %v557 = vld [vmem:[%s3 + $0x18] sm:$0xff]
    %v558 = vld [vmem:[%s3 + $0x20] sm:$0xff]
    %v559 = vld [vmem:[%s3 + $0x28] sm:$0xff]
    %v560 = vld [vmem:[%s3 + $0x30] sm:$0xff]
    %v561 = vld [vmem:[%s3 + $0x38] sm:$0xff]
    %v562 = vld [vmem:[%s3 + $0x40] sm:$0xff]
    %v563 = vld [vmem:[%s3 + $0x48] sm:$0xff]
    %v564 = vld [vmem:[%s3 + $0x50] sm:$0xff]
    %v565 = vld [vmem:[%s3 + $0x58] sm:$0xff]
    %v566 = vld [vmem:[%s3 + $0x60] sm:$0xff]
    %v567 = vld [vmem:[%s3 + $0x68] sm:$0xff]
    %v568 = vld [vmem:[%s3 + $0x70] sm:$0xff]
    %v569 = vld [vmem:[%s3 + $0x78] sm:$0xff]
    %v570 = vld [vmem:[%s3 + $0x80] sm:$0xff]
    %v571 = vld [vmem:[%s3 + $0x88] sm:$0xff]
    %v572 = vld [vmem:[%s3 + $0x90] sm:$0xff]
    %v573 = vld [vmem:[%s3 + $0x98] sm:$0xff]
    %v574 = vld [vmem:[%s3 + $0xa0] sm:$0xff]
    %v575 = vld [vmem:[%s3 + $0xa8] sm:$0xff]
    %v576 = vld [vmem:[%s3 + $0xb0] sm:$0xff]
    %v577 = vld [vmem:[%s3 + $0xb8] sm:$0xff]
    %v578 = vld [vmem:[%s3 + $0xc0] sm:$0xff]
    %v579 = vld [vmem:[%s3 + $0xc8] sm:$0xff]
    %v580 = vld [vmem:[%s3 + $0xd0] sm:$0xff]
    %v581 = vld [vmem:[%s3 + $0xd8] sm:$0xff]
    %v582 = vld [vmem:[%s3 + $0xe0] sm:$0xff]
    %v583 = vld [vmem:[%s3 + $0xe8] sm:$0xff]
    %v584 = vld [vmem:[%s3 + $0xf0] sm:$0xff]
    %v585 = vld [vmem:[%s3 + $0xf8] sm:$0xff]
    %v586 = vld [vmem:[%s3 + $0x100] sm:$0xff]
    %v587 = vld [vmem:[%s3 + $0x108] sm:$0xff]
    %v588 = vld [vmem:[%s3 + $0x110] sm:$0xff]
    %v589 = vld [vmem:[%s3 + $0x118] sm:$0xff]
    %v590 = vld [vmem:[%s3 + $0x120] sm:$0xff]
    %v591 = vld [vmem:[%s3 + $0x128] sm:$0xff]
    %v592 = vld [vmem:[%s3 + $0x130] sm:$0xff]
    %v593 = vld [vmem:[%s3 + $0x138] sm:$0xff]
    %v594 = vld [vmem:[%s3 + $0x140] sm:$0xff]
    %v595 = vld [vmem:[%s3 + $0x148] sm:$0xff]
    %v596 = vld [vmem:[%s3 + $0x150] sm:$0xff]
    %v597 = vld [vmem:[%s3 + $0x158] sm:$0xff]
    %v598 = vld [vmem:[%s3 + $0x160] sm:$0xff]
    %v599 = vld [vmem:[%s3 + $0x168] sm:$0xff]
    %v600 = vld [vmem:[%s3 + $0x170] sm:$0xff]
    %v601 = vld [vmem:[%s3 + $0x178] sm:$0xff]
    %v602 = vld [vmem:[%s3 + $0x180] sm:$0xff]
    %v603 = vld [vmem:[%s3 + $0x188] sm:$0xff]
    %v604 = vld [vmem:[%s3 + $0x190] sm:$0xff]
    %v605 = vld [vmem:[%s3 + $0x198] sm:$0xff]
    %v606 = vld [vmem:[%s3 + $0x1a0] sm:$0xff]
    %v607 = vld [vmem:[%s3 + $0x1a8] sm:$0xff]
    %v608 = vld [vmem:[%s3 + $0x1b0] sm:$0xff]
    %v609 = vld [vmem:[%s3 + $0x1b8] sm:$0xff]
    %v610 = vld [vmem:[%s3 + $0x1c0] sm:$0xff]
    %v611 = vld [vmem:[%s3 + $0x1c8] sm:$0xff]
    %v612 = vld [vmem:[%s3 + $0x1d0] sm:$0xff]
    %v613 = vld [vmem:[%s3 + $0x1d8] sm:$0xff]
    %v614 = vld [vmem:[%s3 + $0x1e0] sm:$0xff]
    %v615 = vld [vmem:[%s3 + $0x1e8] sm:$0xff]
    %v616 = vld [vmem:[%s3 + $0x1f0] sm:$0xff]
    %v617 = vld [vmem:[%s3 + $0x1f8] sm:$0xff]
    %618 = vmatpush.msra.mxu0 %v614
    %619 = vmatpush.msra.mxu0 %v610
    %620 = vmatpush.msra.mxu0 %v606
    %621 = vmatpush.msra.mxu0 %v602
    %622 = vmatpush.msra.mxu0 %v598
    %623 = vmatpush.msra.mxu0 %v594
    %624 = vmatpush.msra.mxu0 %v590
    %625 = vmatpush.msra.mxu0 %v586
    %626 = vmatpush.msra.mxu0 %v582
    %627 = vmatpush.msra.mxu0 %v578
    %628 = vmatpush.msra.mxu0 %v574
    %629 = vmatpush.msra.mxu0 %v570
    %630 = vmatpush.msra.mxu0 %v566
    %631 = vmatpush.msra.mxu0 %v562
    %632 = vmatpush.msra.mxu0 %v558
    %633 = vmatpush.msra.mxu0 %v554
    %634 = vmatmul.f32.gmra.mxu0 %v543
    %v635 = vpop.f32.mrf.mxu0
    %v636 = vadd.f32 0.0, %v635
    %637 = vdwg.mxu0
    %638 = vmatpush.msra.mxu0 %v615
    %639 = vmatpush.msra.mxu0 %v611
    %640 = vmatpush.msra.mxu0 %v607
    %641 = vmatpush.msra.mxu0 %v603
    %642 = vmatpush.msra.mxu0 %v599
    %643 = vmatpush.msra.mxu0 %v595
    %644 = vmatpush.msra.mxu0 %v591
    %645 = vmatpush.msra.mxu0 %v587
    %646 = vmatpush.msra.mxu0 %v583
    %647 = vmatpush.msra.mxu0 %v579
    %648 = vmatpush.msra.mxu0 %v575
    %649 = vmatpush.msra.mxu0 %v571
    %650 = vmatpush.msra.mxu0 %v567
    %651 = vmatpush.msra.mxu0 %v563
    %652 = vmatpush.msra.mxu0 %v559
    %653 = vmatpush.msra.mxu0 %v555
    %654 = vmatmul.f32.gmra.mxu0 %v543
    %v655 = vpop.f32.mrf.mxu0
    %v656 = vadd.f32 0.0, %v655
    %657 = vdwg.mxu0
    %658 = vmatpush.msra.mxu0 %v616
    %659 = vmatpush.msra.mxu0 %v612
    %660 = vmatpush.msra.mxu0 %v608
    %661 = vmatpush.msra.mxu0 %v604
    %662 = vmatpush.msra.mxu0 %v600
    %663 = vmatpush.msra.mxu0 %v596
    %664 = vmatpush.msra.mxu0 %v592
    %665 = vmatpush.msra.mxu0 %v588
    %666 = vmatpush.msra.mxu0 %v584
    %667 = vmatpush.msra.mxu0 %v580
    %668 = vmatpush.msra.mxu0 %v576
    %669 = vmatpush.msra.mxu0 %v572
    %670 = vmatpush.msra.mxu0 %v568
    %671 = vmatpush.msra.mxu0 %v564
    %672 = vmatpush.msra.mxu0 %v560
    %673 = vmatpush.msra.mxu0 %v556
    %674 = vmatmul.f32.gmra.mxu0 %v543
    %v675 = vpop.f32.mrf.mxu0
    %v676 = vadd.f32 0.0, %v675
    %677 = vdwg.mxu0
    %678 = vmatpush.msra.mxu0 %v617
    %679 = vmatpush.msra.mxu0 %v613
    %680 = vmatpush.msra.mxu0 %v609
    %681 = vmatpush.msra.mxu0 %v605
    %682 = vmatpush.msra.mxu0 %v601
    %683 = vmatpush.msra.mxu0 %v597
    %684 = vmatpush.msra.mxu0 %v593
    %685 = vmatpush.msra.mxu0 %v589
    %686 = vmatpush.msra.mxu0 %v585
    %687 = vmatpush.msra.mxu0 %v581
    %688 = vmatpush.msra.mxu0 %v577
    %689 = vmatpush.msra.mxu0 %v573
    %690 = vmatpush.msra.mxu0 %v569
    %691 = vmatpush.msra.mxu0 %v565
    %692 = vmatpush.msra.mxu0 %v561
    %693 = vmatpush.msra.mxu0 %v557
    %694 = vmatmul.f32.gmra.mxu0 %v543
    %v695 = vpop.f32.mrf.mxu0
    %v696 = vadd.f32 0.0, %v695
    %697 = vdwg.mxu0
    %v698 = vadd.f32 %v550, %v636
    %v699 = vadd.f32 %v551, %v656
    %v700 = vadd.f32 %v552, %v676
    %v701 = vadd.f32 %v553, %v696
    %v702 = vxor.u32 %v698, 2147483648
    %v703 = vmul.f32 %v702, 1.442695
    %v704 = vpow.pop %v703
    %v705 = vadd.f32 %v704, 1.0
    %v706 = vrcp.pop %v705
    %v707 = vmul.f32 %v705, %v706
    %v708 = vsub.f32 1.0, %v707
    %v709 = vmul.f32 %v706, %v708
    %v710 = vadd.f32 %v706, %v709
    %vm711 = vweird.f32 %v705
    %vm712 = vweird.f32 %v706
    %vm713 = vmor %vm711, %vm712
    %v714 = vsel %vm713, %v706, %v710
    %v715 = vand.u32 2147483647, %v705
    %vm716 = vcmp.eq.f32.partialorder %v715, 8.507059e+37
    %v717 = vand.u32 %v705, 2147483648
    %v718 = vor.u32 1.1754944e-38, %v717
    %v719 = vsel %vm716, %v718, %v714
    %v720 = vmul.f32 1.0, %v719
    %v721 = vxor.u32 %v699, 2147483648
    %v722 = vmul.f32 %v721, 1.442695
    %v723 = vpow.pop %v722
    %v724 = vadd.f32 %v723, 1.0
    %v725 = vrcp.pop %v724
    %v726 = vmul.f32 %v724, %v725
    %v727 = vsub.f32 1.0, %v726
    %v728 = vmul.f32 %v725, %v727
    %v729 = vadd.f32 %v725, %v728
    %vm730 = vweird.f32 %v724
    %vm731 = vweird.f32 %v725
    %vm732 = vmor %vm730, %vm731
    %v733 = vsel %vm732, %v725, %v729
    %v734 = vand.u32 2147483647, %v724
    %vm735 = vcmp.eq.f32.partialorder %v734, 8.507059e+37
    %v736 = vand.u32 %v724, 2147483648
    %v737 = vor.u32 1.1754944e-38, %v736
    %v738 = vsel %vm735, %v737, %v733
    %v739 = vmul.f32 1.0, %v738
    %v740 = vtanh.pop %v700
    %v741 = vxor.u32 %v701, 2147483648
    %v742 = vmul.f32 %v741, 1.442695
    %v743 = vpow.pop %v742
    %v744 = vadd.f32 %v743, 1.0
    %v745 = vrcp.pop %v744
    %v746 = vmul.f32 %v744, %v745
    %v747 = vsub.f32 1.0, %v746
    %v748 = vmul.f32 %v745, %v747
    %v749 = vadd.f32 %v745, %v748
    %vm750 = vweird.f32 %v744
    %vm751 = vweird.f32 %v745
    %vm752 = vmor %vm750, %vm751
    %v753 = vsel %vm752, %v745, %v749
    %v754 = vand.u32 2147483647, %v744
    %vm755 = vcmp.eq.f32.partialorder %v754, 8.507059e+37
    %v756 = vand.u32 %v744, 2147483648
    %v757 = vor.u32 1.1754944e-38, %v756
    %v758 = vsel %vm755, %v757, %v753
    %v759 = vmul.f32 1.0, %v758
    %v760 = vmul.f32 %v739, %v541
    %v761 = vmul.f32 %v720, %v740
    %v762 = vadd.f32 %v760, %v761
    %v763 = vtanh.pop %v762
    %v764 = vmul.f32 %v759, %v763
    %s765 = scalar_lea.vmem [#allocation3], 8
    %766 = vst [vmem:[%s765] sm:$0xff] %v764
    %s767 = scalar_lea.vmem [#allocation4], 48
    %768 = vst [vmem:[%s767] sm:$0xff] %v764
    %s769 = smul.u32 2, 4
    %s770 = smul.addr %s769, 8
    %s771 = scalar_lea.vmem [#allocation2], %s770
    %v772 = vld [vmem:[%s771] sm:$0xff]
    %v773 = vld [vmem:[%s771 + $0x8] sm:$0xff]
    %v774 = vld [vmem:[%s771 + $0x10] sm:$0xff]
    %v775 = vld [vmem:[%s771 + $0x18] sm:$0xff]
    %v776 = vld [vmem:[%s3] sm:$0xff]
    %v777 = vld [vmem:[%s3 + $0x8] sm:$0xff]
    %v778 = vld [vmem:[%s3 + $0x10] sm:$0xff]
    %v779 = vld [vmem:[%s3 + $0x18] sm:$0xff]
    %v780 = vld [vmem:[%s3 + $0x20] sm:$0xff]
    %v781 = vld [vmem:[%s3 + $0x28] sm:$0xff]
    %v782 = vld [vmem:[%s3 + $0x30] sm:$0xff]
    %v783 = vld [vmem:[%s3 + $0x38] sm:$0xff]
    %v784 = vld [vmem:[%s3 + $0x40] sm:$0xff]
    %v785 = vld [vmem:[%s3 + $0x48] sm:$0xff]
    %v786 = vld [vmem:[%s3 + $0x50] sm:$0xff]
    %v787 = vld [vmem:[%s3 + $0x58] sm:$0xff]
    %v788 = vld [vmem:[%s3 + $0x60] sm:$0xff]
    %v789 = vld [vmem:[%s3 + $0x68] sm:$0xff]
    %v790 = vld [vmem:[%s3 + $0x70] sm:$0xff]
    %v791 = vld [vmem:[%s3 + $0x78] sm:$0xff]
    %v792 = vld [vmem:[%s3 + $0x80] sm:$0xff]
    %v793 = vld [vmem:[%s3 + $0x88] sm:$0xff]
    %v794 = vld [vmem:[%s3 + $0x90] sm:$0xff]
    %v795 = vld [vmem:[%s3 + $0x98] sm:$0xff]
    %v796 = vld [vmem:[%s3 + $0xa0] sm:$0xff]
    %v797 = vld [vmem:[%s3 + $0xa8] sm:$0xff]
    %v798 = vld [vmem:[%s3 + $0xb0] sm:$0xff]
    %v799 = vld [vmem:[%s3 + $0xb8] sm:$0xff]
    %v800 = vld [vmem:[%s3 + $0xc0] sm:$0xff]
    %v801 = vld [vmem:[%s3 + $0xc8] sm:$0xff]
    %v802 = vld [vmem:[%s3 + $0xd0] sm:$0xff]
    %v803 = vld [vmem:[%s3 + $0xd8] sm:$0xff]
    %v804 = vld [vmem:[%s3 + $0xe0] sm:$0xff]
    %v805 = vld [vmem:[%s3 + $0xe8] sm:$0xff]
    %v806 = vld [vmem:[%s3 + $0xf0] sm:$0xff]
    %v807 = vld [vmem:[%s3 + $0xf8] sm:$0xff]
    %v808 = vld [vmem:[%s3 + $0x100] sm:$0xff]
    %v809 = vld [vmem:[%s3 + $0x108] sm:$0xff]
    %v810 = vld [vmem:[%s3 + $0x110] sm:$0xff]
    %v811 = vld [vmem:[%s3 + $0x118] sm:$0xff]
    %v812 = vld [vmem:[%s3 + $0x120] sm:$0xff]
    %v813 = vld [vmem:[%s3 + $0x128] sm:$0xff]
    %v814 = vld [vmem:[%s3 + $0x130] sm:$0xff]
    %v815 = vld [vmem:[%s3 + $0x138] sm:$0xff]
    %v816 = vld [vmem:[%s3 + $0x140] sm:$0xff]
    %v817 = vld [vmem:[%s3 + $0x148] sm:$0xff]
    %v818 = vld [vmem:[%s3 + $0x150] sm:$0xff]
    %v819 = vld [vmem:[%s3 + $0x158] sm:$0xff]
    %v820 = vld [vmem:[%s3 + $0x160] sm:$0xff]
    %v821 = vld [vmem:[%s3 + $0x168] sm:$0xff]
    %v822 = vld [vmem:[%s3 + $0x170] sm:$0xff]
    %v823 = vld [vmem:[%s3 + $0x178] sm:$0xff]
    %v824 = vld [vmem:[%s3 + $0x180] sm:$0xff]
    %v825 = vld [vmem:[%s3 + $0x188] sm:$0xff]
    %v826 = vld [vmem:[%s3 + $0x190] sm:$0xff]
    %v827 = vld [vmem:[%s3 + $0x198] sm:$0xff]
    %v828 = vld [vmem:[%s3 + $0x1a0] sm:$0xff]
    %v829 = vld [vmem:[%s3 + $0x1a8] sm:$0xff]
    %v830 = vld [vmem:[%s3 + $0x1b0] sm:$0xff]
    %v831 = vld [vmem:[%s3 + $0x1b8] sm:$0xff]
    %v832 = vld [vmem:[%s3 + $0x1c0] sm:$0xff]
    %v833 = vld [vmem:[%s3 + $0x1c8] sm:$0xff]
    %v834 = vld [vmem:[%s3 + $0x1d0] sm:$0xff]
    %v835 = vld [vmem:[%s3 + $0x1d8] sm:$0xff]
    %v836 = vld [vmem:[%s3 + $0x1e0] sm:$0xff]
    %v837 = vld [vmem:[%s3 + $0x1e8] sm:$0xff]
    %v838 = vld [vmem:[%s3 + $0x1f0] sm:$0xff]
    %v839 = vld [vmem:[%s3 + $0x1f8] sm:$0xff]
    %840 = vmatpush.msra.mxu0 %v836
    %841 = vmatpush.msra.mxu0 %v832
    %842 = vmatpush.msra.mxu0 %v828
    %843 = vmatpush.msra.mxu0 %v824
    %844 = vmatpush.msra.mxu0 %v820
    %845 = vmatpush.msra.mxu0 %v816
    %846 = vmatpush.msra.mxu0 %v812
    %847 = vmatpush.msra.mxu0 %v808
    %848 = vmatpush.msra.mxu0 %v804
    %849 = vmatpush.msra.mxu0 %v800
    %850 = vmatpush.msra.mxu0 %v796
    %851 = vmatpush.msra.mxu0 %v792
    %852 = vmatpush.msra.mxu0 %v788
    %853 = vmatpush.msra.mxu0 %v784
    %854 = vmatpush.msra.mxu0 %v780
    %855 = vmatpush.msra.mxu0 %v776
    %856 = vmatmul.f32.gmra.mxu0 %v764
    %v857 = vpop.f32.mrf.mxu0
    %v858 = vadd.f32 0.0, %v857
    %859 = vdwg.mxu0
    %860 = vmatpush.msra.mxu0 %v837
    %861 = vmatpush.msra.mxu0 %v833
    %862 = vmatpush.msra.mxu0 %v829
    %863 = vmatpush.msra.mxu0 %v825
    %864 = vmatpush.msra.mxu0 %v821
    %865 = vmatpush.msra.mxu0 %v817
    %866 = vmatpush.msra.mxu0 %v813
    %867 = vmatpush.msra.mxu0 %v809
    %868 = vmatpush.msra.mxu0 %v805
    %869 = vmatpush.msra.mxu0 %v801
    %870 = vmatpush.msra.mxu0 %v797
    %871 = vmatpush.msra.mxu0 %v793
    %872 = vmatpush.msra.mxu0 %v789
    %873 = vmatpush.msra.mxu0 %v785
    %874 = vmatpush.msra.mxu0 %v781
    %875 = vmatpush.msra.mxu0 %v777
    %876 = vmatmul.f32.gmra.mxu0 %v764
    %v877 = vpop.f32.mrf.mxu0
    %v878 = vadd.f32 0.0, %v877
    %879 = vdwg.mxu0
    %880 = vmatpush.msra.mxu0 %v838
    %881 = vmatpush.msra.mxu0 %v834
    %882 = vmatpush.msra.mxu0 %v830
    %883 = vmatpush.msra.mxu0 %v826
    %884 = vmatpush.msra.mxu0 %v822
    %885 = vmatpush.msra.mxu0 %v818
    %886 = vmatpush.msra.mxu0 %v814
    %887 = vmatpush.msra.mxu0 %v810
    %888 = vmatpush.msra.mxu0 %v806
    %889 = vmatpush.msra.mxu0 %v802
    %890 = vmatpush.msra.mxu0 %v798
    %891 = vmatpush.msra.mxu0 %v794
    %892 = vmatpush.msra.mxu0 %v790
    %893 = vmatpush.msra.mxu0 %v786
    %894 = vmatpush.msra.mxu0 %v782
    %895 = vmatpush.msra.mxu0 %v778
    %896 = vmatmul.f32.gmra.mxu0 %v764
    %v897 = vpop.f32.mrf.mxu0
    %v898 = vadd.f32 0.0, %v897
    %899 = vdwg.mxu0
    %900 = vmatpush.msra.mxu0 %v839
    %901 = vmatpush.msra.mxu0 %v835
    %902 = vmatpush.msra.mxu0 %v831
    %903 = vmatpush.msra.mxu0 %v827
    %904 = vmatpush.msra.mxu0 %v823
    %905 = vmatpush.msra.mxu0 %v819
    %906 = vmatpush.msra.mxu0 %v815
    %907 = vmatpush.msra.mxu0 %v811
    %908 = vmatpush.msra.mxu0 %v807
    %909 = vmatpush.msra.mxu0 %v803
    %910 = vmatpush.msra.mxu0 %v799
    %911 = vmatpush.msra.mxu0 %v795
    %912 = vmatpush.msra.mxu0 %v791
    %913 = vmatpush.msra.mxu0 %v787
    %914 = vmatpush.msra.mxu0 %v783
    %915 = vmatpush.msra.mxu0 %v779
    %916 = vmatmul.f32.gmra.mxu0 %v764
    %v917 = vpop.f32.mrf.mxu0
    %v918 = vadd.f32 0.0, %v917
    %919 = vdwg.mxu0
    %v920 = vadd.f32 %v772, %v858
    %v921 = vadd.f32 %v773, %v878
    %v922 = vadd.f32 %v774, %v898
    %v923 = vadd.f32 %v775, %v918
    %v924 = vxor.u32 %v920, 2147483648
    %v925 = vmul.f32 %v924, 1.442695
    %v926 = vpow.pop %v925
    %v927 = vadd.f32 %v926, 1.0
    %v928 = vrcp.pop %v927
    %v929 = vmul.f32 %v927, %v928
    %v930 = vsub.f32 1.0, %v929
    %v931 = vmul.f32 %v928, %v930
    %v932 = vadd.f32 %v928, %v931
    %vm933 = vweird.f32 %v927
    %vm934 = vweird.f32 %v928
    %vm935 = vmor %vm933, %vm934
    %v936 = vsel %vm935, %v928, %v932
    %v937 = vand.u32 2147483647, %v927
    %vm938 = vcmp.eq.f32.partialorder %v937, 8.507059e+37
    %v939 = vand.u32 %v927, 2147483648
    %v940 = vor.u32 1.1754944e-38, %v939
    %v941 = vsel %vm938, %v940, %v936
    %v942 = vmul.f32 1.0, %v941
    %v943 = vxor.u32 %v921, 2147483648
    %v944 = vmul.f32 %v943, 1.442695
    %v945 = vpow.pop %v944
    %v946 = vadd.f32 %v945, 1.0
    %v947 = vrcp.pop %v946
    %v948 = vmul.f32 %v946, %v947
    %v949 = vsub.f32 1.0, %v948
    %v950 = vmul.f32 %v947, %v949
    %v951 = vadd.f32 %v947, %v950
    %vm952 = vweird.f32 %v946
    %vm953 = vweird.f32 %v947
    %vm954 = vmor %vm952, %vm953
    %v955 = vsel %vm954, %v947, %v951
    %v956 = vand.u32 2147483647, %v946
    %vm957 = vcmp.eq.f32.partialorder %v956, 8.507059e+37
    %v958 = vand.u32 %v946, 2147483648
    %v959 = vor.u32 1.1754944e-38, %v958
    %v960 = vsel %vm957, %v959, %v955
    %v961 = vmul.f32 1.0, %v960
    %v962 = vtanh.pop %v922
    %v963 = vxor.u32 %v923, 2147483648
    %v964 = vmul.f32 %v963, 1.442695
    %v965 = vpow.pop %v964
    %v966 = vadd.f32 %v965, 1.0
    %v967 = vrcp.pop %v966
    %v968 = vmul.f32 %v966, %v967
    %v969 = vsub.f32 1.0, %v968
    %v970 = vmul.f32 %v967, %v969
    %v971 = vadd.f32 %v967, %v970
    %vm972 = vweird.f32 %v966
    %vm973 = vweird.f32 %v967
    %vm974 = vmor %vm972, %vm973
    %v975 = vsel %vm974, %v967, %v971
    %v976 = vand.u32 2147483647, %v966
    %vm977 = vcmp.eq.f32.partialorder %v976, 8.507059e+37
    %v978 = vand.u32 %v966, 2147483648
    %v979 = vor.u32 1.1754944e-38, %v978
    %v980 = vsel %vm977, %v979, %v975
    %v981 = vmul.f32 1.0, %v980
    %v982 = vmul.f32 %v961, %v762
    %v983 = vmul.f32 %v942, %v962
    %v984 = vadd.f32 %v982, %v983
    %v985 = vtanh.pop %v984
    %v986 = vmul.f32 %v981, %v985
    %s987 = scalar_lea.vmem [#allocation3], 16
    %988 = vst [vmem:[%s987] sm:$0xff] %v986
    %s989 = scalar_lea.vmem [#allocation4], 40
    %990 = vst [vmem:[%s989] sm:$0xff] %v986
    %s991 = smul.u32 3, 4
    %s992 = smul.addr %s991, 8
    %s993 = scalar_lea.vmem [#allocation2], %s992
    %v994 = vld [vmem:[%s993] sm:$0xff]
    %v995 = vld [vmem:[%s993 + $0x8] sm:$0xff]
    %v996 = vld [vmem:[%s993 + $0x10] sm:$0xff]
    %v997 = vld [vmem:[%s993 + $0x18] sm:$0xff]
    %v998 = vld [vmem:[%s3] sm:$0xff]
    %v999 = vld [vmem:[%s3 + $0x8] sm:$0xff]
    %v1000 = vld [vmem:[%s3 + $0x10] sm:$0xff]
    %v1001 = vld [vmem:[%s3 + $0x18] sm:$0xff]
    %v1002 = vld [vmem:[%s3 + $0x20] sm:$0xff]
    %v1003 = vld [vmem:[%s3 + $0x28] sm:$0xff]
    %v1004 = vld [vmem:[%s3 + $0x30] sm:$0xff]
    %v1005 = vld [vmem:[%s3 + $0x38] sm:$0xff]
    %v1006 = vld [vmem:[%s3 + $0x40] sm:$0xff]
    %v1007 = vld [vmem:[%s3 + $0x48] sm:$0xff]
    %v1008 = vld [vmem:[%s3 + $0x50] sm:$0xff]
    %v1009 = vld [vmem:[%s3 + $0x58] sm:$0xff]
    %v1010 = vld [vmem:[%s3 + $0x60] sm:$0xff]
    %v1011 = vld [vmem:[%s3 + $0x68] sm:$0xff]
    %v1012 = vld [vmem:[%s3 + $0x70] sm:$0xff]
    %v1013 = vld [vmem:[%s3 + $0x78] sm:$0xff]
    %v1014 = vld [vmem:[%s3 + $0x80] sm:$0xff]
    %v1015 = vld [vmem:[%s3 + $0x88] sm:$0xff]
    %v1016 = vld [vmem:[%s3 + $0x90] sm:$0xff]
    %v1017 = vld [vmem:[%s3 + $0x98] sm:$0xff]
    %v1018 = vld [vmem:[%s3 + $0xa0] sm:$0xff]
    %v1019 = vld [vmem:[%s3 + $0xa8] sm:$0xff]
    %v1020 = vld [vmem:[%s3 + $0xb0] sm:$0xff]
    %v1021 = vld [vmem:[%s3 + $0xb8] sm:$0xff]
    %v1022 = vld [vmem:[%s3 + $0xc0] sm:$0xff]
    %v1023 = vld [vmem:[%s3 + $0xc8] sm:$0xff]
    %v1024 = vld [vmem:[%s3 + $0xd0] sm:$0xff]
    %v1025 = vld [vmem:[%s3 + $0xd8] sm:$0xff]
    %v1026 = vld [vmem:[%s3 + $0xe0] sm:$0xff]
    %v1027 = vld [vmem:[%s3 + $0xe8] sm:$0xff]
    %v1028 = vld [vmem:[%s3 + $0xf0] sm:$0xff]
    %v1029 = vld [vmem:[%s3 + $0xf8] sm:$0xff]
    %v1030 = vld [vmem:[%s3 + $0x100] sm:$0xff]
    %v1031 = vld [vmem:[%s3 + $0x108] sm:$0xff]
    %v1032 = vld [vmem:[%s3 + $0x110] sm:$0xff]
    %v1033 = vld [vmem:[%s3 + $0x118] sm:$0xff]
    %v1034 = vld [vmem:[%s3 + $0x120] sm:$0xff]
    %v1035 = vld [vmem:[%s3 + $0x128] sm:$0xff]
    %v1036 = vld [vmem:[%s3 + $0x130] sm:$0xff]
    %v1037 = vld [vmem:[%s3 + $0x138] sm:$0xff]
    %v1038 = vld [vmem:[%s3 + $0x140] sm:$0xff]
    %v1039 = vld [vmem:[%s3 + $0x148] sm:$0xff]
    %v1040 = vld [vmem:[%s3 + $0x150] sm:$0xff]
    %v1041 = vld [vmem:[%s3 + $0x158] sm:$0xff]
    %v1042 = vld [vmem:[%s3 + $0x160] sm:$0xff]
    %v1043 = vld [vmem:[%s3 + $0x168] sm:$0xff]
    %v1044 = vld [vmem:[%s3 + $0x170] sm:$0xff]
    %v1045 = vld [vmem:[%s3 + $0x178] sm:$0xff]
    %v1046 = vld [vmem:[%s3 + $0x180] sm:$0xff]
    %v1047 = vld [vmem:[%s3 + $0x188] sm:$0xff]
    %v1048 = vld [vmem:[%s3 + $0x190] sm:$0xff]
    %v1049 = vld [vmem:[%s3 + $0x198] sm:$0xff]
    %v1050 = vld [vmem:[%s3 + $0x1a0] sm:$0xff]
    %v1051 = vld [vmem:[%s3 + $0x1a8] sm:$0xff]
    %v1052 = vld [vmem:[%s3 + $0x1b0] sm:$0xff]
    %v1053 = vld [vmem:[%s3 + $0x1b8] sm:$0xff]
    %v1054 = vld [vmem:[%s3 + $0x1c0] sm:$0xff]
    %v1055 = vld [vmem:[%s3 + $0x1c8] sm:$0xff]
    %v1056 = vld [vmem:[%s3 + $0x1d0] sm:$0xff]
    %v1057 = vld [vmem:[%s3 + $0x1d8] sm:$0xff]
    %v1058 = vld [vmem:[%s3 + $0x1e0] sm:$0xff]
    %v1059 = vld [vmem:[%s3 + $0x1e8] sm:$0xff]
    %v1060 = vld [vmem:[%s3 + $0x1f0] sm:$0xff]
    %v1061 = vld [vmem:[%s3 + $0x1f8] sm:$0xff]
    %1062 = vmatpush.msra.mxu0 %v1058
    %1063 = vmatpush.msra.mxu0 %v1054
    %1064 = vmatpush.msra.mxu0 %v1050
    %1065 = vmatpush.msra.mxu0 %v1046
    %1066 = vmatpush.msra.mxu0 %v1042
    %1067 = vmatpush.msra.mxu0 %v1038
    %1068 = vmatpush.msra.mxu0 %v1034
    %1069 = vmatpush.msra.mxu0 %v1030
    %1070 = vmatpush.msra.mxu0 %v1026
    %1071 = vmatpush.msra.mxu0 %v1022
    %1072 = vmatpush.msra.mxu0 %v1018
    %1073 = vmatpush.msra.mxu0 %v1014
    %1074 = vmatpush.msra.mxu0 %v1010
    %1075 = vmatpush.msra.mxu0 %v1006
    %1076 = vmatpush.msra.mxu0 %v1002
    %1077 = vmatpush.msra.mxu0 %v998
    %1078 = vmatmul.f32.gmra.mxu0 %v986
    %v1079 = vpop.f32.mrf.mxu0
    %v1080 = vadd.f32 0.0, %v1079
    %1081 = vdwg.mxu0
    %1082 = vmatpush.msra.mxu0 %v1059
    %1083 = vmatpush.msra.mxu0 %v1055
    %1084 = vmatpush.msra.mxu0 %v1051
    %1085 = vmatpush.msra.mxu0 %v1047
    %1086 = vmatpush.msra.mxu0 %v1043
    %1087 = vmatpush.msra.mxu0 %v1039
    %1088 = vmatpush.msra.mxu0 %v1035
    %1089 = vmatpush.msra.mxu0 %v1031
    %1090 = vmatpush.msra.mxu0 %v1027
    %1091 = vmatpush.msra.mxu0 %v1023
    %1092 = vmatpush.msra.mxu0 %v1019
    %1093 = vmatpush.msra.mxu0 %v1015
    %1094 = vmatpush.msra.mxu0 %v1011
    %1095 = vmatpush.msra.mxu0 %v1007
    %1096 = vmatpush.msra.mxu0 %v1003
    %1097 = vmatpush.msra.mxu0 %v999
    %1098 = vmatmul.f32.gmra.mxu0 %v986
    %v1099 = vpop.f32.mrf.mxu0
    %v1100 = vadd.f32 0.0, %v1099
    %1101 = vdwg.mxu0
    %1102 = vmatpush.msra.mxu0 %v1060
    %1103 = vmatpush.msra.mxu0 %v1056
    %1104 = vmatpush.msra.mxu0 %v1052
    %1105 = vmatpush.msra.mxu0 %v1048
    %1106 = vmatpush.msra.mxu0 %v1044
    %1107 = vmatpush.msra.mxu0 %v1040
    %1108 = vmatpush.msra.mxu0 %v1036
    %1109 = vmatpush.msra.mxu0 %v1032
    %1110 = vmatpush.msra.mxu0 %v1028
    %1111 = vmatpush.msra.mxu0 %v1024
    %1112 = vmatpush.msra.mxu0 %v1020
    %1113 = vmatpush.msra.mxu0 %v1016
    %1114 = vmatpush.msra.mxu0 %v1012
    %1115 = vmatpush.msra.mxu0 %v1008
    %1116 = vmatpush.msra.mxu0 %v1004
    %1117 = vmatpush.msra.mxu0 %v1000
    %1118 = vmatmul.f32.gmra.mxu0 %v986
    %v1119 = vpop.f32.mrf.mxu0
    %v1120 = vadd.f32 0.0, %v1119
    %1121 = vdwg.mxu0
    %1122 = vmatpush.msra.mxu0 %v1061
    %1123 = vmatpush.msra.mxu0 %v1057
    %1124 = vmatpush.msra.mxu0 %v1053
    %1125 = vmatpush.msra.mxu0 %v1049
    %1126 = vmatpush.msra.mxu0 %v1045
    %1127 = vmatpush.msra.mxu0 %v1041
    %1128 = vmatpush.msra.mxu0 %v1037
    %1129 = vmatpush.msra.mxu0 %v1033
    %1130 = vmatpush.msra.mxu0 %v1029
    %1131 = vmatpush.msra.mxu0 %v1025
    %1132 = vmatpush.msra.mxu0 %v1021
    %1133 = vmatpush.msra.mxu0 %v1017
    %1134 = vmatpush.msra.mxu0 %v1013
    %1135 = vmatpush.msra.mxu0 %v1009
    %1136 = vmatpush.msra.mxu0 %v1005
    %1137 = vmatpush.msra.mxu0 %v1001
    %1138 = vmatmul.f32.gmra.mxu0 %v986
    %v1139 = vpop.f32.mrf.mxu0
    %v1140 = vadd.f32 0.0, %v1139
    %1141 = vdwg.mxu0
    %v1142 = vadd.f32 %v994, %v1080
    %v1143 = vadd.f32 %v995, %v1100
    %v1144 = vadd.f32 %v996, %v1120
    %v1145 = vadd.f32 %v997, %v1140
    %v1146 = vxor.u32 %v1142, 2147483648
    %v1147 = vmul.f32 %v1146, 1.442695
    %v1148 = vpow.pop %v1147
    %v1149 = vadd.f32 %v1148, 1.0
    %v1150 = vrcp.pop %v1149
    %v1151 = vmul.f32 %v1149, %v1150
    %v1152 = vsub.f32 1.0, %v1151
    %v1153 = vmul.f32 %v1150, %v1152
    %v1154 = vadd.f32 %v1150, %v1153
    %vm1155 = vweird.f32 %v1149
    %vm1156 = vweird.f32 %v1150
    %vm1157 = vmor %vm1155, %vm1156
    %v1158 = vsel %vm1157, %v1150, %v1154
    %v1159 = vand.u32 2147483647, %v1149
    %vm1160 = vcmp.eq.f32.partialorder %v1159, 8.507059e+37
    %v1161 = vand.u32 %v1149, 2147483648
    %v1162 = vor.u32 1.1754944e-38, %v1161
    %v1163 = vsel %vm1160, %v1162, %v1158
    %v1164 = vmul.f32 1.0, %v1163
    %v1165 = vxor.u32 %v1143, 2147483648
    %v1166 = vmul.f32 %v1165, 1.442695
    %v1167 = vpow.pop %v1166
    %v1168 = vadd.f32 %v1167, 1.0
    %v1169 = vrcp.pop %v1168
    %v1170 = vmul.f32 %v1168, %v1169
    %v1171 = vsub.f32 1.0, %v1170
    %v1172 = vmul.f32 %v1169, %v1171
    %v1173 = vadd.f32 %v1169, %v1172
    %vm1174 = vweird.f32 %v1168
    %vm1175 = vweird.f32 %v1169
    %vm1176 = vmor %vm1174, %vm1175
    %v1177 = vsel %vm1176, %v1169, %v1173
    %v1178 = vand.u32 2147483647, %v1168
    %vm1179 = vcmp.eq.f32.partialorder %v1178, 8.507059e+37
    %v1180 = vand.u32 %v1168, 2147483648
    %v1181 = vor.u32 1.1754944e-38, %v1180
    %v1182 = vsel %vm1179, %v1181, %v1177
    %v1183 = vmul.f32 1.0, %v1182
    %v1184 = vtanh.pop %v1144
    %v1185 = vxor.u32 %v1145, 2147483648
    %v1186 = vmul.f32 %v1185, 1.442695
    %v1187 = vpow.pop %v1186
    %v1188 = vadd.f32 %v1187, 1.0
    %v1189 = vrcp.pop %v1188
    %v1190 = vmul.f32 %v1188, %v1189
    %v1191 = vsub.f32 1.0, %v1190
    %v1192 = vmul.f32 %v1189, %v1191
    %v1193 = vadd.f32 %v1189, %v1192
    %vm1194 = vweird.f32 %v1188
    %vm1195 = vweird.f32 %v1189
    %vm1196 = vmor %vm1194, %vm1195
    %v1197 = vsel %vm1196, %v1189, %v1193
    %v1198 = vand.u32 2147483647, %v1188
    %vm1199 = vcmp.eq.f32.partialorder %v1198, 8.507059e+37
    %v1200 = vand.u32 %v1188, 2147483648
    %v1201 = vor.u32 1.1754944e-38, %v1200
    %v1202 = vsel %vm1199, %v1201, %v1197
    %v1203 = vmul.f32 1.0, %v1202
    %v1204 = vmul.f32 %v1183, %v984
    %v1205 = vmul.f32 %v1164, %v1184
    %v1206 = vadd.f32 %v1204, %v1205
    %v1207 = vtanh.pop %v1206
    %v1208 = vmul.f32 %v1203, %v1207
    %s1209 = scalar_lea.vmem [#allocation3], 24
    %1210 = vst [vmem:[%s1209] sm:$0xff] %v1208
    %s1211 = scalar_lea.vmem [#allocation4], 32
    %1212 = vst [vmem:[%s1211] sm:$0xff] %v1208
    %s1213 = smul.u32 4, 4
    %s1214 = smul.addr %s1213, 8
    %s1215 = scalar_lea.vmem [#allocation2], %s1214
    %v1216 = vld [vmem:[%s1215] sm:$0xff]
    %v1217 = vld [vmem:[%s1215 + $0x8] sm:$0xff]
    %v1218 = vld [vmem:[%s1215 + $0x10] sm:$0xff]
    %v1219 = vld [vmem:[%s1215 + $0x18] sm:$0xff]
    %v1220 = vld [vmem:[%s3] sm:$0xff]
    %v1221 = vld [vmem:[%s3 + $0x8] sm:$0xff]
    %v1222 = vld [vmem:[%s3 + $0x10] sm:$0xff]
    %v1223 = vld [vmem:[%s3 + $0x18] sm:$0xff]
    %v1224 = vld [vmem:[%s3 + $0x20] sm:$0xff]
    %v1225 = vld [vmem:[%s3 + $0x28] sm:$0xff]
    %v1226 = vld [vmem:[%s3 + $0x30] sm:$0xff]
    %v1227 = vld [vmem:[%s3 + $0x38] sm:$0xff]
    %v1228 = vld [vmem:[%s3 + $0x40] sm:$0xff]
    %v1229 = vld [vmem:[%s3 + $0x48] sm:$0xff]
    %v1230 = vld [vmem:[%s3 + $0x50] sm:$0xff]
    %v1231 = vld [vmem:[%s3 + $0x58] sm:$0xff]
    %v1232 = vld [vmem:[%s3 + $0x60] sm:$0xff]
    %v1233 = vld [vmem:[%s3 + $0x68] sm:$0xff]
    %v1234 = vld [vmem:[%s3 + $0x70] sm:$0xff]
    %v1235 = vld [vmem:[%s3 + $0x78] sm:$0xff]
    %v1236 = vld [vmem:[%s3 + $0x80] sm:$0xff]
    %v1237 = vld [vmem:[%s3 + $0x88] sm:$0xff]
    %v1238 = vld [vmem:[%s3 + $0x90] sm:$0xff]
    %v1239 = vld [vmem:[%s3 + $0x98] sm:$0xff]
    %v1240 = vld [vmem:[%s3 + $0xa0] sm:$0xff]
    %v1241 = vld [vmem:[%s3 + $0xa8] sm:$0xff]
    %v1242 = vld [vmem:[%s3 + $0xb0] sm:$0xff]
    %v1243 = vld [vmem:[%s3 + $0xb8] sm:$0xff]
    %v1244 = vld [vmem:[%s3 + $0xc0] sm:$0xff]
    %v1245 = vld [vmem:[%s3 + $0xc8] sm:$0xff]
    %v1246 = vld [vmem:[%s3 + $0xd0] sm:$0xff]
    %v1247 = vld [vmem:[%s3 + $0xd8] sm:$0xff]
    %v1248 = vld [vmem:[%s3 + $0xe0] sm:$0xff]
    %v1249 = vld [vmem:[%s3 + $0xe8] sm:$0xff]
    %v1250 = vld [vmem:[%s3 + $0xf0] sm:$0xff]
    %v1251 = vld [vmem:[%s3 + $0xf8] sm:$0xff]
    %v1252 = vld [vmem:[%s3 + $0x100] sm:$0xff]
    %v1253 = vld [vmem:[%s3 + $0x108] sm:$0xff]
    %v1254 = vld [vmem:[%s3 + $0x110] sm:$0xff]
    %v1255 = vld [vmem:[%s3 + $0x118] sm:$0xff]
    %v1256 = vld [vmem:[%s3 + $0x120] sm:$0xff]
    %v1257 = vld [vmem:[%s3 + $0x128] sm:$0xff]
    %v1258 = vld [vmem:[%s3 + $0x130] sm:$0xff]
    %v1259 = vld [vmem:[%s3 + $0x138] sm:$0xff]
    %v1260 = vld [vmem:[%s3 + $0x140] sm:$0xff]
    %v1261 = vld [vmem:[%s3 + $0x148] sm:$0xff]
    %v1262 = vld [vmem:[%s3 + $0x150] sm:$0xff]
    %v1263 = vld [vmem:[%s3 + $0x158] sm:$0xff]
    %v1264 = vld [vmem:[%s3 + $0x160] sm:$0xff]
    %v1265 = vld [vmem:[%s3 + $0x168] sm:$0xff]
    %v1266 = vld [vmem:[%s3 + $0x170] sm:$0xff]
    %v1267 = vld [vmem:[%s3 + $0x178] sm:$0xff]
    %v1268 = vld [vmem:[%s3 + $0x180] sm:$0xff]
    %v1269 = vld [vmem:[%s3 + $0x188] sm:$0xff]
    %v1270 = vld [vmem:[%s3 + $0x190] sm:$0xff]
    %v1271 = vld [vmem:[%s3 + $0x198] sm:$0xff]
    %v1272 = vld [vmem:[%s3 + $0x1a0] sm:$0xff]
    %v1273 = vld [vmem:[%s3 + $0x1a8] sm:$0xff]
    %v1274 = vld [vmem:[%s3 + $0x1b0] sm:$0xff]
    %v1275 = vld [vmem:[%s3 + $0x1b8] sm:$0xff]
    %v1276 = vld [vmem:[%s3 + $0x1c0] sm:$0xff]
    %v1277 = vld [vmem:[%s3 + $0x1c8] sm:$0xff]
    %v1278 = vld [vmem:[%s3 + $0x1d0] sm:$0xff]
    %v1279 = vld [vmem:[%s3 + $0x1d8] sm:$0xff]
    %v1280 = vld [vmem:[%s3 + $0x1e0] sm:$0xff]
    %v1281 = vld [vmem:[%s3 + $0x1e8] sm:$0xff]
    %v1282 = vld [vmem:[%s3 + $0x1f0] sm:$0xff]
    %v1283 = vld [vmem:[%s3 + $0x1f8] sm:$0xff]
    %1284 = vmatpush.msra.mxu0 %v1280
    %1285 = vmatpush.msra.mxu0 %v1276
    %1286 = vmatpush.msra.mxu0 %v1272
    %1287 = vmatpush.msra.mxu0 %v1268
    %1288 = vmatpush.msra.mxu0 %v1264
    %1289 = vmatpush.msra.mxu0 %v1260
    %1290 = vmatpush.msra.mxu0 %v1256
    %1291 = vmatpush.msra.mxu0 %v1252
    %1292 = vmatpush.msra.mxu0 %v1248
    %1293 = vmatpush.msra.mxu0 %v1244
    %1294 = vmatpush.msra.mxu0 %v1240
    %1295 = vmatpush.msra.mxu0 %v1236
    %1296 = vmatpush.msra.mxu0 %v1232
    %1297 = vmatpush.msra.mxu0 %v1228
    %1298 = vmatpush.msra.mxu0 %v1224
    %1299 = vmatpush.msra.mxu0 %v1220
    %1300 = vmatmul.f32.gmra.mxu0 %v1208
    %v1301 = vpop.f32.mrf.mxu0
    %v1302 = vadd.f32 0.0, %v1301
    %1303 = vdwg.mxu0
    %1304 = vmatpush.msra.mxu0 %v1281
    %1305 = vmatpush.msra.mxu0 %v1277
    %1306 = vmatpush.msra.mxu0 %v1273
    %1307 = vmatpush.msra.mxu0 %v1269
    %1308 = vmatpush.msra.mxu0 %v1265
    %1309 = vmatpush.msra.mxu0 %v1261
    %1310 = vmatpush.msra.mxu0 %v1257
    %1311 = vmatpush.msra.mxu0 %v1253
    %1312 = vmatpush.msra.mxu0 %v1249
    %1313 = vmatpush.msra.mxu0 %v1245
    %1314 = vmatpush.msra.mxu0 %v1241
    %1315 = vmatpush.msra.mxu0 %v1237
    %1316 = vmatpush.msra.mxu0 %v1233
    %1317 = vmatpush.msra.mxu0 %v1229
    %1318 = vmatpush.msra.mxu0 %v1225
    %1319 = vmatpush.msra.mxu0 %v1221
    %1320 = vmatmul.f32.gmra.mxu0 %v1208
    %v1321 = vpop.f32.mrf.mxu0
    %v1322 = vadd.f32 0.0, %v1321
    %1323 = vdwg.mxu0
    %1324 = vmatpush.msra.mxu0 %v1282
    %1325 = vmatpush.msra.mxu0 %v1278
    %1326 = vmatpush.msra.mxu0 %v1274
    %1327 = vmatpush.msra.mxu0 %v1270
    %1328 = vmatpush.msra.mxu0 %v1266
    %1329 = vmatpush.msra.mxu0 %v1262
    %1330 = vmatpush.msra.mxu0 %v1258
    %1331 = vmatpush.msra.mxu0 %v1254
    %1332 = vmatpush.msra.mxu0 %v1250
    %1333 = vmatpush.msra.mxu0 %v1246
    %1334 = vmatpush.msra.mxu0 %v1242
    %1335 = vmatpush.msra.mxu0 %v1238
    %1336 = vmatpush.msra.mxu0 %v1234
    %1337 = vmatpush.msra.mxu0 %v1230
    %1338 = vmatpush.msra.mxu0 %v1226
    %1339 = vmatpush.msra.mxu0 %v1222
    %1340 = vmatmul.f32.gmra.mxu0 %v1208
    %v1341 = vpop.f32.mrf.mxu0
    %v1342 = vadd.f32 0.0, %v1341
    %1343 = vdwg.mxu0
    %1344 = vmatpush.msra.mxu0 %v1283
    %1345 = vmatpush.msra.mxu0 %v1279
    %1346 = vmatpush.msra.mxu0 %v1275
    %1347 = vmatpush.msra.mxu0 %v1271
    %1348 = vmatpush.msra.mxu0 %v1267
    %1349 = vmatpush.msra.mxu0 %v1263
    %1350 = vmatpush.msra.mxu0 %v1259
    %1351 = vmatpush.msra.mxu0 %v1255
    %1352 = vmatpush.msra.mxu0 %v1251
    %1353 = vmatpush.msra.mxu0 %v1247
    %1354 = vmatpush.msra.mxu0 %v1243
    %1355 = vmatpush.msra.mxu0 %v1239
    %1356 = vmatpush.msra.mxu0 %v1235
    %1357 = vmatpush.msra.mxu0 %v1231
    %1358 = vmatpush.msra.mxu0 %v1227
    %1359 = vmatpush.msra.mxu0 %v1223
    %1360 = vmatmul.f32.gmra.mxu0 %v1208
    %v1361 = vpop.f32.mrf.mxu0
    %v1362 = vadd.f32 0.0, %v1361
    %1363 = vdwg.mxu0
    %v1364 = vadd.f32 %v1216, %v1302
    %v1365 = vadd.f32 %v1217, %v1322
    %v1366 = vadd.f32 %v1218, %v1342
    %v1367 = vadd.f32 %v1219, %v1362
    %v1368 = vxor.u32 %v1364, 2147483648
    %v1369 = vmul.f32 %v1368, 1.442695
    %v1370 = vpow.pop %v1369
    %v1371 = vadd.f32 %v1370, 1.0
    %v1372 = vrcp.pop %v1371
    %v1373 = vmul.f32 %v1371, %v1372
    %v1374 = vsub.f32 1.0, %v1373
    %v1375 = vmul.f32 %v1372, %v1374
    %v1376 = vadd.f32 %v1372, %v1375
    %vm1377 = vweird.f32 %v1371
    %vm1378 = vweird.f32 %v1372
    %vm1379 = vmor %vm1377, %vm1378
    %v1380 = vsel %vm1379, %v1372, %v1376
    %v1381 = vand.u32 2147483647, %v1371
    %vm1382 = vcmp.eq.f32.partialorder %v1381, 8.507059e+37
    %v1383 = vand.u32 %v1371, 2147483648
    %v1384 = vor.u32 1.1754944e-38, %v1383
    %v1385 = vsel %vm1382, %v1384, %v1380
    %v1386 = vmul.f32 1.0, %v1385
    %v1387 = vxor.u32 %v1365, 2147483648
    %v1388 = vmul.f32 %v1387, 1.442695
    %v1389 = vpow.pop %v1388
    %v1390 = vadd.f32 %v1389, 1.0
    %v1391 = vrcp.pop %v1390
    %v1392 = vmul.f32 %v1390, %v1391
    %v1393 = vsub.f32 1.0, %v1392
    %v1394 = vmul.f32 %v1391, %v1393
    %v1395 = vadd.f32 %v1391, %v1394
    %vm1396 = vweird.f32 %v1390
    %vm1397 = vweird.f32 %v1391
    %vm1398 = vmor %vm1396, %vm1397
    %v1399 = vsel %vm1398, %v1391, %v1395
    %v1400 = vand.u32 2147483647, %v1390
    %vm1401 = vcmp.eq.f32.partialorder %v1400, 8.507059e+37
    %v1402 = vand.u32 %v1390, 2147483648
    %v1403 = vor.u32 1.1754944e-38, %v1402
    %v1404 = vsel %vm1401, %v1403, %v1399
    %v1405 = vmul.f32 1.0, %v1404
    %v1406 = vtanh.pop %v1366
    %v1407 = vxor.u32 %v1367, 2147483648
    %v1408 = vmul.f32 %v1407, 1.442695
    %v1409 = vpow.pop %v1408
    %v1410 = vadd.f32 %v1409, 1.0
    %v1411 = vrcp.pop %v1410
    %v1412 = vmul.f32 %v1410, %v1411
    %v1413 = vsub.f32 1.0, %v1412
    %v1414 = vmul.f32 %v1411, %v1413
    %v1415 = vadd.f32 %v1411, %v1414
    %vm1416 = vweird.f32 %v1410
    %vm1417 = vweird.f32 %v1411
    %vm1418 = vmor %vm1416, %vm1417
    %v1419 = vsel %vm1418, %v1411, %v1415
    %v1420 = vand.u32 2147483647, %v1410
    %vm1421 = vcmp.eq.f32.partialorder %v1420, 8.507059e+37
    %v1422 = vand.u32 %v1410, 2147483648
    %v1423 = vor.u32 1.1754944e-38, %v1422
    %v1424 = vsel %vm1421, %v1423, %v1419
    %v1425 = vmul.f32 1.0, %v1424
    %v1426 = vmul.f32 %v1405, %v1206
    %v1427 = vmul.f32 %v1386, %v1406
    %v1428 = vadd.f32 %v1426, %v1427
    %v1429 = vtanh.pop %v1428
    %v1430 = vmul.f32 %v1425, %v1429
    %s1431 = scalar_lea.vmem [#allocation3], 32
    %1432 = vst [vmem:[%s1431] sm:$0xff] %v1430
    %s1433 = scalar_lea.vmem [#allocation4], 24
    %1434 = vst [vmem:[%s1433] sm:$0xff] %v1430
    %s1435 = smul.u32 5, 4
    %s1436 = smul.addr %s1435, 8
    %s1437 = scalar_lea.vmem [#allocation2], %s1436
    %v1438 = vld [vmem:[%s1437] sm:$0xff]
    %v1439 = vld [vmem:[%s1437 + $0x8] sm:$0xff]
    %v1440 = vld [vmem:[%s1437 + $0x10] sm:$0xff]
    %v1441 = vld [vmem:[%s1437 + $0x18] sm:$0xff]
    %v1442 = vld [vmem:[%s3] sm:$0xff]
    %v1443 = vld [vmem:[%s3 + $0x8] sm:$0xff]
    %v1444 = vld [vmem:[%s3 + $0x10] sm:$0xff]
    %v1445 = vld [vmem:[%s3 + $0x18] sm:$0xff]
    %v1446 = vld [vmem:[%s3 + $0x20] sm:$0xff]
    %v1447 = vld [vmem:[%s3 + $0x28] sm:$0xff]
    %v1448 = vld [vmem:[%s3 + $0x30] sm:$0xff]
    %v1449 = vld [vmem:[%s3 + $0x38] sm:$0xff]
    %v1450 = vld [vmem:[%s3 + $0x40] sm:$0xff]
    %v1451 = vld [vmem:[%s3 + $0x48] sm:$0xff]
    %v1452 = vld [vmem:[%s3 + $0x50] sm:$0xff]
    %v1453 = vld [vmem:[%s3 + $0x58] sm:$0xff]
    %v1454 = vld [vmem:[%s3 + $0x60] sm:$0xff]
    %v1455 = vld [vmem:[%s3 + $0x68] sm:$0xff]
    %v1456 = vld [vmem:[%s3 + $0x70] sm:$0xff]
    %v1457 = vld [vmem:[%s3 + $0x78] sm:$0xff]
    %v1458 = vld [vmem:[%s3 + $0x80] sm:$0xff]
    %v1459 = vld [vmem:[%s3 + $0x88] sm:$0xff]
    %v1460 = vld [vmem:[%s3 + $0x90] sm:$0xff]
    %v1461 = vld [vmem:[%s3 + $0x98] sm:$0xff]
    %v1462 = vld [vmem:[%s3 + $0xa0] sm:$0xff]
    %v1463 = vld [vmem:[%s3 + $0xa8] sm:$0xff]
    %v1464 = vld [vmem:[%s3 + $0xb0] sm:$0xff]
    %v1465 = vld [vmem:[%s3 + $0xb8] sm:$0xff]
    %v1466 = vld [vmem:[%s3 + $0xc0] sm:$0xff]
    %v1467 = vld [vmem:[%s3 + $0xc8] sm:$0xff]
    %v1468 = vld [vmem:[%s3 + $0xd0] sm:$0xff]
    %v1469 = vld [vmem:[%s3 + $0xd8] sm:$0xff]
    %v1470 = vld [vmem:[%s3 + $0xe0] sm:$0xff]
    %v1471 = vld [vmem:[%s3 + $0xe8] sm:$0xff]
    %v1472 = vld [vmem:[%s3 + $0xf0] sm:$0xff]
    %v1473 = vld [vmem:[%s3 + $0xf8] sm:$0xff]
    %v1474 = vld [vmem:[%s3 + $0x100] sm:$0xff]
    %v1475 = vld [vmem:[%s3 + $0x108] sm:$0xff]
    %v1476 = vld [vmem:[%s3 + $0x110] sm:$0xff]
    %v1477 = vld [vmem:[%s3 + $0x118] sm:$0xff]
    %v1478 = vld [vmem:[%s3 + $0x120] sm:$0xff]
    %v1479 = vld [vmem:[%s3 + $0x128] sm:$0xff]
    %v1480 = vld [vmem:[%s3 + $0x130] sm:$0xff]
    %v1481 = vld [vmem:[%s3 + $0x138] sm:$0xff]
    %v1482 = vld [vmem:[%s3 + $0x140] sm:$0xff]
    %v1483 = vld [vmem:[%s3 + $0x148] sm:$0xff]
    %v1484 = vld [vmem:[%s3 + $0x150] sm:$0xff]
    %v1485 = vld [vmem:[%s3 + $0x158] sm:$0xff]
    %v1486 = vld [vmem:[%s3 + $0x160] sm:$0xff]
    %v1487 = vld [vmem:[%s3 + $0x168] sm:$0xff]
    %v1488 = vld [vmem:[%s3 + $0x170] sm:$0xff]
    %v1489 = vld [vmem:[%s3 + $0x178] sm:$0xff]
    %v1490 = vld [vmem:[%s3 + $0x180] sm:$0xff]
    %v1491 = vld [vmem:[%s3 + $0x188] sm:$0xff]
    %v1492 = vld [vmem:[%s3 + $0x190] sm:$0xff]
    %v1493 = vld [vmem:[%s3 + $0x198] sm:$0xff]
    %v1494 = vld [vmem:[%s3 + $0x1a0] sm:$0xff]
    %v1495 = vld [vmem:[%s3 + $0x1a8] sm:$0xff]
    %v1496 = vld [vmem:[%s3 + $0x1b0] sm:$0xff]
    %v1497 = vld [vmem:[%s3 + $0x1b8] sm:$0xff]
    %v1498 = vld [vmem:[%s3 + $0x1c0] sm:$0xff]
    %v1499 = vld [vmem:[%s3 + $0x1c8] sm:$0xff]
    %v1500 = vld [vmem:[%s3 + $0x1d0] sm:$0xff]
    %v1501 = vld [vmem:[%s3 + $0x1d8] sm:$0xff]
    %v1502 = vld [vmem:[%s3 + $0x1e0] sm:$0xff]
    %v1503 = vld [vmem:[%s3 + $0x1e8] sm:$0xff]
    %v1504 = vld [vmem:[%s3 + $0x1f0] sm:$0xff]
    %v1505 = vld [vmem:[%s3 + $0x1f8] sm:$0xff]
    %1506 = vmatpush.msra.mxu0 %v1502
    %1507 = vmatpush.msra.mxu0 %v1498
    %1508 = vmatpush.msra.mxu0 %v1494
    %1509 = vmatpush.msra.mxu0 %v1490
    %1510 = vmatpush.msra.mxu0 %v1486
    %1511 = vmatpush.msra.mxu0 %v1482
    %1512 = vmatpush.msra.mxu0 %v1478
    %1513 = vmatpush.msra.mxu0 %v1474
    %1514 = vmatpush.msra.mxu0 %v1470
    %1515 = vmatpush.msra.mxu0 %v1466
    %1516 = vmatpush.msra.mxu0 %v1462
    %1517 = vmatpush.msra.mxu0 %v1458
    %1518 = vmatpush.msra.mxu0 %v1454
    %1519 = vmatpush.msra.mxu0 %v1450
    %1520 = vmatpush.msra.mxu0 %v1446
    %1521 = vmatpush.msra.mxu0 %v1442
    %1522 = vmatmul.f32.gmra.mxu0 %v1430
    %v1523 = vpop.f32.mrf.mxu0
    %v1524 = vadd.f32 0.0, %v1523
    %1525 = vdwg.mxu0
    %1526 = vmatpush.msra.mxu0 %v1503
    %1527 = vmatpush.msra.mxu0 %v1499
    %1528 = vmatpush.msra.mxu0 %v1495
    %1529 = vmatpush.msra.mxu0 %v1491
    %1530 = vmatpush.msra.mxu0 %v1487
    %1531 = vmatpush.msra.mxu0 %v1483
    %1532 = vmatpush.msra.mxu0 %v1479
    %1533 = vmatpush.msra.mxu0 %v1475
    %1534 = vmatpush.msra.mxu0 %v1471
    %1535 = vmatpush.msra.mxu0 %v1467
    %1536 = vmatpush.msra.mxu0 %v1463
    %1537 = vmatpush.msra.mxu0 %v1459
    %1538 = vmatpush.msra.mxu0 %v1455
    %1539 = vmatpush.msra.mxu0 %v1451
    %1540 = vmatpush.msra.mxu0 %v1447
    %1541 = vmatpush.msra.mxu0 %v1443
    %1542 = vmatmul.f32.gmra.mxu0 %v1430
    %v1543 = vpop.f32.mrf.mxu0
    %v1544 = vadd.f32 0.0, %v1543
    %1545 = vdwg.mxu0
    %1546 = vmatpush.msra.mxu0 %v1504
    %1547 = vmatpush.msra.mxu0 %v1500
    %1548 = vmatpush.msra.mxu0 %v1496
    %1549 = vmatpush.msra.mxu0 %v1492
    %1550 = vmatpush.msra.mxu0 %v1488
    %1551 = vmatpush.msra.mxu0 %v1484
    %1552 = vmatpush.msra.mxu0 %v1480
    %1553 = vmatpush.msra.mxu0 %v1476
    %1554 = vmatpush.msra.mxu0 %v1472
    %1555 = vmatpush.msra.mxu0 %v1468
    %1556 = vmatpush.msra.mxu0 %v1464
    %1557 = vmatpush.msra.mxu0 %v1460
    %1558 = vmatpush.msra.mxu0 %v1456
    %1559 = vmatpush.msra.mxu0 %v1452
    %1560 = vmatpush.msra.mxu0 %v1448
    %1561 = vmatpush.msra.mxu0 %v1444
    %1562 = vmatmul.f32.gmra.mxu0 %v1430
    %v1563 = vpop.f32.mrf.mxu0
    %v1564 = vadd.f32 0.0, %v1563
    %1565 = vdwg.mxu0
    %1566 = vmatpush.msra.mxu0 %v1505
    %1567 = vmatpush.msra.mxu0 %v1501
    %1568 = vmatpush.msra.mxu0 %v1497
    %1569 = vmatpush.msra.mxu0 %v1493
    %1570 = vmatpush.msra.mxu0 %v1489
    %1571 = vmatpush.msra.mxu0 %v1485
    %1572 = vmatpush.msra.mxu0 %v1481
    %1573 = vmatpush.msra.mxu0 %v1477
    %1574 = vmatpush.msra.mxu0 %v1473
    %1575 = vmatpush.msra.mxu0 %v1469
    %1576 = vmatpush.msra.mxu0 %v1465
    %1577 = vmatpush.msra.mxu0 %v1461
    %1578 = vmatpush.msra.mxu0 %v1457
    %1579 = vmatpush.msra.mxu0 %v1453
    %1580 = vmatpush.msra.mxu0 %v1449
    %1581 = vmatpush.msra.mxu0 %v1445
    %1582 = vmatmul.f32.gmra.mxu0 %v1430
    %v1583 = vpop.f32.mrf.mxu0
    %v1584 = vadd.f32 0.0, %v1583
    %1585 = vdwg.mxu0
    %v1586 = vadd.f32 %v1438, %v1524
    %v1587 = vadd.f32 %v1439, %v1544
    %v1588 = vadd.f32 %v1440, %v1564
    %v1589 = vadd.f32 %v1441, %v1584
    %v1590 = vxor.u32 %v1586, 2147483648
    %v1591 = vmul.f32 %v1590, 1.442695
    %v1592 = vpow.pop %v1591
    %v1593 = vadd.f32 %v1592, 1.0
    %v1594 = vrcp.pop %v1593
    %v1595 = vmul.f32 %v1593, %v1594
    %v1596 = vsub.f32 1.0, %v1595
    %v1597 = vmul.f32 %v1594, %v1596
    %v1598 = vadd.f32 %v1594, %v1597
    %vm1599 = vweird.f32 %v1593
    %vm1600 = vweird.f32 %v1594
    %vm1601 = vmor %vm1599, %vm1600
    %v1602 = vsel %vm1601, %v1594, %v1598
    %v1603 = vand.u32 2147483647, %v1593
    %vm1604 = vcmp.eq.f32.partialorder %v1603, 8.507059e+37
    %v1605 = vand.u32 %v1593, 2147483648
    %v1606 = vor.u32 1.1754944e-38, %v1605
    %v1607 = vsel %vm1604, %v1606, %v1602
    %v1608 = vmul.f32 1.0, %v1607
    %v1609 = vxor.u32 %v1587, 2147483648
    %v1610 = vmul.f32 %v1609, 1.442695
    %v1611 = vpow.pop %v1610
    %v1612 = vadd.f32 %v1611, 1.0
    %v1613 = vrcp.pop %v1612
    %v1614 = vmul.f32 %v1612, %v1613
    %v1615 = vsub.f32 1.0, %v1614
    %v1616 = vmul.f32 %v1613, %v1615
    %v1617 = vadd.f32 %v1613, %v1616
    %vm1618 = vweird.f32 %v1612
    %vm1619 = vweird.f32 %v1613
    %vm1620 = vmor %vm1618, %vm1619
    %v1621 = vsel %vm1620, %v1613, %v1617
    %v1622 = vand.u32 2147483647, %v1612
    %vm1623 = vcmp.eq.f32.partialorder %v1622, 8.507059e+37
    %v1624 = vand.u32 %v1612, 2147483648
    %v1625 = vor.u32 1.1754944e-38, %v1624
    %v1626 = vsel %vm1623, %v1625, %v1621
    %v1627 = vmul.f32 1.0, %v1626
    %v1628 = vtanh.pop %v1588
    %v1629 = vxor.u32 %v1589, 2147483648
    %v1630 = vmul.f32 %v1629, 1.442695
    %v1631 = vpow.pop %v1630
    %v1632 = vadd.f32 %v1631, 1.0
    %v1633 = vrcp.pop %v1632
    %v1634 = vmul.f32 %v1632, %v1633
    %v1635 = vsub.f32 1.0, %v1634
    %v1636 = vmul.f32 %v1633, %v1635
    %v1637 = vadd.f32 %v1633, %v1636
    %vm1638 = vweird.f32 %v1632
    %vm1639 = vweird.f32 %v1633
    %vm1640 = vmor %vm1638, %vm1639
    %v1641 = vsel %vm1640, %v1633, %v1637
    %v1642 = vand.u32 2147483647, %v1632
    %vm1643 = vcmp.eq.f32.partialorder %v1642, 8.507059e+37
    %v1644 = vand.u32 %v1632, 2147483648
    %v1645 = vor.u32 1.1754944e-38, %v1644
    %v1646 = vsel %vm1643, %v1645, %v1641
    %v1647 = vmul.f32 1.0, %v1646
    %v1648 = vmul.f32 %v1627, %v1428
    %v1649 = vmul.f32 %v1608, %v1628
    %v1650 = vadd.f32 %v1648, %v1649
    %v1651 = vtanh.pop %v1650
    %v1652 = vmul.f32 %v1647, %v1651
    %s1653 = scalar_lea.vmem [#allocation3], 40
    %1654 = vst [vmem:[%s1653] sm:$0xff] %v1652
    %s1655 = scalar_lea.vmem [#allocation4], 16
    %1656 = vst [vmem:[%s1655] sm:$0xff] %v1652
    %s1657 = smul.u32 6, 4
    %s1658 = smul.addr %s1657, 8
    %s1659 = scalar_lea.vmem [#allocation2], %s1658
    %v1660 = vld [vmem:[%s1659] sm:$0xff]
    %v1661 = vld [vmem:[%s1659 + $0x8] sm:$0xff]
    %v1662 = vld [vmem:[%s1659 + $0x10] sm:$0xff]
    %v1663 = vld [vmem:[%s1659 + $0x18] sm:$0xff]
    %v1664 = vld [vmem:[%s3] sm:$0xff]
    %v1665 = vld [vmem:[%s3 + $0x8] sm:$0xff]
    %v1666 = vld [vmem:[%s3 + $0x10] sm:$0xff]
    %v1667 = vld [vmem:[%s3 + $0x18] sm:$0xff]
    %v1668 = vld [vmem:[%s3 + $0x20] sm:$0xff]
    %v1669 = vld [vmem:[%s3 + $0x28] sm:$0xff]
    %v1670 = vld [vmem:[%s3 + $0x30] sm:$0xff]
    %v1671 = vld [vmem:[%s3 + $0x38] sm:$0xff]
    %v1672 = vld [vmem:[%s3 + $0x40] sm:$0xff]
    %v1673 = vld [vmem:[%s3 + $0x48] sm:$0xff]
    %v1674 = vld [vmem:[%s3 + $0x50] sm:$0xff]
    %v1675 = vld [vmem:[%s3 + $0x58] sm:$0xff]
    %v1676 = vld [vmem:[%s3 + $0x60] sm:$0xff]
    %v1677 = vld [vmem:[%s3 + $0x68] sm:$0xff]
    %v1678 = vld [vmem:[%s3 + $0x70] sm:$0xff]
    %v1679 = vld [vmem:[%s3 + $0x78] sm:$0xff]
    %v1680 = vld [vmem:[%s3 + $0x80] sm:$0xff]
    %v1681 = vld [vmem:[%s3 + $0x88] sm:$0xff]
    %v1682 = vld [vmem:[%s3 + $0x90] sm:$0xff]
    %v1683 = vld [vmem:[%s3 + $0x98] sm:$0xff]
    %v1684 = vld [vmem:[%s3 + $0xa0] sm:$0xff]
    %v1685 = vld [vmem:[%s3 + $0xa8] sm:$0xff]
    %v1686 = vld [vmem:[%s3 + $0xb0] sm:$0xff]
    %v1687 = vld [vmem:[%s3 + $0xb8] sm:$0xff]
    %v1688 = vld [vmem:[%s3 + $0xc0] sm:$0xff]
    %v1689 = vld [vmem:[%s3 + $0xc8] sm:$0xff]
    %v1690 = vld [vmem:[%s3 + $0xd0] sm:$0xff]
    %v1691 = vld [vmem:[%s3 + $0xd8] sm:$0xff]
    %v1692 = vld [vmem:[%s3 + $0xe0] sm:$0xff]
    %v1693 = vld [vmem:[%s3 + $0xe8] sm:$0xff]
    %v1694 = vld [vmem:[%s3 + $0xf0] sm:$0xff]
    %v1695 = vld [vmem:[%s3 + $0xf8] sm:$0xff]
    %v1696 = vld [vmem:[%s3 + $0x100] sm:$0xff]
    %v1697 = vld [vmem:[%s3 + $0x108] sm:$0xff]
    %v1698 = vld [vmem:[%s3 + $0x110] sm:$0xff]
    %v1699 = vld [vmem:[%s3 + $0x118] sm:$0xff]
    %v1700 = vld [vmem:[%s3 + $0x120] sm:$0xff]
    %v1701 = vld [vmem:[%s3 + $0x128] sm:$0xff]
    %v1702 = vld [vmem:[%s3 + $0x130] sm:$0xff]
    %v1703 = vld [vmem:[%s3 + $0x138] sm:$0xff]
    %v1704 = vld [vmem:[%s3 + $0x140] sm:$0xff]
    %v1705 = vld [vmem:[%s3 + $0x148] sm:$0xff]
    %v1706 = vld [vmem:[%s3 + $0x150] sm:$0xff]
    %v1707 = vld [vmem:[%s3 + $0x158] sm:$0xff]
    %v1708 = vld [vmem:[%s3 + $0x160] sm:$0xff]
    %v1709 = vld [vmem:[%s3 + $0x168] sm:$0xff]
    %v1710 = vld [vmem:[%s3 + $0x170] sm:$0xff]
    %v1711 = vld [vmem:[%s3 + $0x178] sm:$0xff]
    %v1712 = vld [vmem:[%s3 + $0x180] sm:$0xff]
    %v1713 = vld [vmem:[%s3 + $0x188] sm:$0xff]
    %v1714 = vld [vmem:[%s3 + $0x190] sm:$0xff]
    %v1715 = vld [vmem:[%s3 + $0x198] sm:$0xff]
    %v1716 = vld [vmem:[%s3 + $0x1a0] sm:$0xff]
    %v1717 = vld [vmem:[%s3 + $0x1a8] sm:$0xff]
    %v1718 = vld [vmem:[%s3 + $0x1b0] sm:$0xff]
    %v1719 = vld [vmem:[%s3 + $0x1b8] sm:$0xff]
    %v1720 = vld [vmem:[%s3 + $0x1c0] sm:$0xff]
    %v1721 = vld [vmem:[%s3 + $0x1c8] sm:$0xff]
    %v1722 = vld [vmem:[%s3 + $0x1d0] sm:$0xff]
    %v1723 = vld [vmem:[%s3 + $0x1d8] sm:$0xff]
    %v1724 = vld [vmem:[%s3 + $0x1e0] sm:$0xff]
    %v1725 = vld [vmem:[%s3 + $0x1e8] sm:$0xff]
    %v1726 = vld [vmem:[%s3 + $0x1f0] sm:$0xff]
    %v1727 = vld [vmem:[%s3 + $0x1f8] sm:$0xff]
    %1728 = vmatpush.msra.mxu0 %v1724
    %1729 = vmatpush.msra.mxu0 %v1720
    %1730 = vmatpush.msra.mxu0 %v1716
    %1731 = vmatpush.msra.mxu0 %v1712
    %1732 = vmatpush.msra.mxu0 %v1708
    %1733 = vmatpush.msra.mxu0 %v1704
    %1734 = vmatpush.msra.mxu0 %v1700
    %1735 = vmatpush.msra.mxu0 %v1696
    %1736 = vmatpush.msra.mxu0 %v1692
    %1737 = vmatpush.msra.mxu0 %v1688
    %1738 = vmatpush.msra.mxu0 %v1684
    %1739 = vmatpush.msra.mxu0 %v1680
    %1740 = vmatpush.msra.mxu0 %v1676
    %1741 = vmatpush.msra.mxu0 %v1672
    %1742 = vmatpush.msra.mxu0 %v1668
    %1743 = vmatpush.msra.mxu0 %v1664
    %1744 = vmatmul.f32.gmra.mxu0 %v1652
    %v1745 = vpop.f32.mrf.mxu0
    %v1746 = vadd.f32 0.0, %v1745
    %1747 = vdwg.mxu0
    %1748 = vmatpush.msra.mxu0 %v1725
    %1749 = vmatpush.msra.mxu0 %v1721
    %1750 = vmatpush.msra.mxu0 %v1717
    %1751 = vmatpush.msra.mxu0 %v1713
    %1752 = vmatpush.msra.mxu0 %v1709
    %1753 = vmatpush.msra.mxu0 %v1705
    %1754 = vmatpush.msra.mxu0 %v1701
    %1755 = vmatpush.msra.mxu0 %v1697
    %1756 = vmatpush.msra.mxu0 %v1693
    %1757 = vmatpush.msra.mxu0 %v1689
    %1758 = vmatpush.msra.mxu0 %v1685
    %1759 = vmatpush.msra.mxu0 %v1681
    %1760 = vmatpush.msra.mxu0 %v1677
    %1761 = vmatpush.msra.mxu0 %v1673
    %1762 = vmatpush.msra.mxu0 %v1669
    %1763 = vmatpush.msra.mxu0 %v1665
    %1764 = vmatmul.f32.gmra.mxu0 %v1652
    %v1765 = vpop.f32.mrf.mxu0
    %v1766 = vadd.f32 0.0, %v1765
    %1767 = vdwg.mxu0
    %1768 = vmatpush.msra.mxu0 %v1726
    %1769 = vmatpush.msra.mxu0 %v1722
    %1770 = vmatpush.msra.mxu0 %v1718
    %1771 = vmatpush.msra.mxu0 %v1714
    %1772 = vmatpush.msra.mxu0 %v1710
    %1773 = vmatpush.msra.mxu0 %v1706
    %1774 = vmatpush.msra.mxu0 %v1702
    %1775 = vmatpush.msra.mxu0 %v1698
    %1776 = vmatpush.msra.mxu0 %v1694
    %1777 = vmatpush.msra.mxu0 %v1690
    %1778 = vmatpush.msra.mxu0 %v1686
    %1779 = vmatpush.msra.mxu0 %v1682
    %1780 = vmatpush.msra.mxu0 %v1678
    %1781 = vmatpush.msra.mxu0 %v1674
    %1782 = vmatpush.msra.mxu0 %v1670
    %1783 = vmatpush.msra.mxu0 %v1666
    %1784 = vmatmul.f32.gmra.mxu0 %v1652
    %v1785 = vpop.f32.mrf.mxu0
    %v1786 = vadd.f32 0.0, %v1785
    %1787 = vdwg.mxu0
    %1788 = vmatpush.msra.mxu0 %v1727
    %1789 = vmatpush.msra.mxu0 %v1723
    %1790 = vmatpush.msra.mxu0 %v1719
    %1791 = vmatpush.msra.mxu0 %v1715
    %1792 = vmatpush.msra.mxu0 %v1711
    %1793 = vmatpush.msra.mxu0 %v1707
    %1794 = vmatpush.msra.mxu0 %v1703
    %1795 = vmatpush.msra.mxu0 %v1699
    %1796 = vmatpush.msra.mxu0 %v1695
    %1797 = vmatpush.msra.mxu0 %v1691
    %1798 = vmatpush.msra.mxu0 %v1687
    %1799 = vmatpush.msra.mxu0 %v1683
    %1800 = vmatpush.msra.mxu0 %v1679
    %1801 = vmatpush.msra.mxu0 %v1675
    %1802 = vmatpush.msra.mxu0 %v1671
    %1803 = vmatpush.msra.mxu0 %v1667
    %1804 = vmatmul.f32.gmra.mxu0 %v1652
    %v1805 = vpop.f32.mrf.mxu0
    %v1806 = vadd.f32 0.0, %v1805
    %1807 = vdwg.mxu0
    %v1808 = vadd.f32 %v1660, %v1746
    %v1809 = vadd.f32 %v1661, %v1766
    %v1810 = vadd.f32 %v1662, %v1786
    %v1811 = vadd.f32 %v1663, %v1806
    %v1812 = vxor.u32 %v1808, 2147483648
    %v1813 = vmul.f32 %v1812, 1.442695
    %v1814 = vpow.pop %v1813
    %v1815 = vadd.f32 %v1814, 1.0
    %v1816 = vrcp.pop %v1815
    %v1817 = vmul.f32 %v1815, %v1816
    %v1818 = vsub.f32 1.0, %v1817
    %v1819 = vmul.f32 %v1816, %v1818
    %v1820 = vadd.f32 %v1816, %v1819
    %vm1821 = vweird.f32 %v1815
    %vm1822 = vweird.f32 %v1816
    %vm1823 = vmor %vm1821, %vm1822
    %v1824 = vsel %vm1823, %v1816, %v1820
    %v1825 = vand.u32 2147483647, %v1815
    %vm1826 = vcmp.eq.f32.partialorder %v1825, 8.507059e+37
    %v1827 = vand.u32 %v1815, 2147483648
    %v1828 = vor.u32 1.1754944e-38, %v1827
    %v1829 = vsel %vm1826, %v1828, %v1824
    %v1830 = vmul.f32 1.0, %v1829
    %v1831 = vxor.u32 %v1809, 2147483648
    %v1832 = vmul.f32 %v1831, 1.442695
    %v1833 = vpow.pop %v1832
    %v1834 = vadd.f32 %v1833, 1.0
    %v1835 = vrcp.pop %v1834
    %v1836 = vmul.f32 %v1834, %v1835
    %v1837 = vsub.f32 1.0, %v1836
    %v1838 = vmul.f32 %v1835, %v1837
    %v1839 = vadd.f32 %v1835, %v1838
    %vm1840 = vweird.f32 %v1834
    %vm1841 = vweird.f32 %v1835
    %vm1842 = vmor %vm1840, %vm1841
    %v1843 = vsel %vm1842, %v1835, %v1839
    %v1844 = vand.u32 2147483647, %v1834
    %vm1845 = vcmp.eq.f32.partialorder %v1844, 8.507059e+37
    %v1846 = vand.u32 %v1834, 2147483648
    %v1847 = vor.u32 1.1754944e-38, %v1846
    %v1848 = vsel %vm1845, %v1847, %v1843
    %v1849 = vmul.f32 1.0, %v1848
    %v1850 = vtanh.pop %v1810
    %v1851 = vxor.u32 %v1811, 2147483648
    %v1852 = vmul.f32 %v1851, 1.442695
    %v1853 = vpow.pop %v1852
    %v1854 = vadd.f32 %v1853, 1.0
    %v1855 = vrcp.pop %v1854
    %v1856 = vmul.f32 %v1854, %v1855
    %v1857 = vsub.f32 1.0, %v1856
    %v1858 = vmul.f32 %v1855, %v1857
    %v1859 = vadd.f32 %v1855, %v1858
    %vm1860 = vweird.f32 %v1854
    %vm1861 = vweird.f32 %v1855
    %vm1862 = vmor %vm1860, %vm1861
    %v1863 = vsel %vm1862, %v1855, %v1859
    %v1864 = vand.u32 2147483647, %v1854
    %vm1865 = vcmp.eq.f32.partialorder %v1864, 8.507059e+37
    %v1866 = vand.u32 %v1854, 2147483648
    %v1867 = vor.u32 1.1754944e-38, %v1866
    %v1868 = vsel %vm1865, %v1867, %v1863
    %v1869 = vmul.f32 1.0, %v1868
    %v1870 = vmul.f32 %v1849, %v1650
    %v1871 = vmul.f32 %v1830, %v1850
    %v1872 = vadd.f32 %v1870, %v1871
    %v1873 = vtanh.pop %v1872
    %v1874 = vmul.f32 %v1869, %v1873
    %s1875 = scalar_lea.vmem [#allocation3], 48
    %1876 = vst [vmem:[%s1875] sm:$0xff] %v1874
    %s1877 = scalar_lea.vmem [#allocation4], 8
    %1878 = vst [vmem:[%s1877] sm:$0xff] %v1874
    %s1879 = smul.u32 7, 4
    %s1880 = smul.addr %s1879, 8
    %s1881 = scalar_lea.vmem [#allocation2], %s1880
    %v1882 = vld [vmem:[%s1881] sm:$0xff]
    %v1883 = vld [vmem:[%s1881 + $0x8] sm:$0xff]
    %v1884 = vld [vmem:[%s1881 + $0x10] sm:$0xff]
    %v1885 = vld [vmem:[%s1881 + $0x18] sm:$0xff]
    %v1886 = vld [vmem:[%s3] sm:$0xff]
    %v1887 = vld [vmem:[%s3 + $0x8] sm:$0xff]
    %v1888 = vld [vmem:[%s3 + $0x10] sm:$0xff]
    %v1889 = vld [vmem:[%s3 + $0x18] sm:$0xff]
    %v1890 = vld [vmem:[%s3 + $0x20] sm:$0xff]
    %v1891 = vld [vmem:[%s3 + $0x28] sm:$0xff]
    %v1892 = vld [vmem:[%s3 + $0x30] sm:$0xff]
    %v1893 = vld [vmem:[%s3 + $0x38] sm:$0xff]
    %v1894 = vld [vmem:[%s3 + $0x40] sm:$0xff]
    %v1895 = vld [vmem:[%s3 + $0x48] sm:$0xff]
    %v1896 = vld [vmem:[%s3 + $0x50] sm:$0xff]
    %v1897 = vld [vmem:[%s3 + $0x58] sm:$0xff]
    %v1898 = vld [vmem:[%s3 + $0x60] sm:$0xff]
    %v1899 = vld [vmem:[%s3 + $0x68] sm:$0xff]
    %v1900 = vld [vmem:[%s3 + $0x70] sm:$0xff]
    %v1901 = vld [vmem:[%s3 + $0x78] sm:$0xff]
    %v1902 = vld [vmem:[%s3 + $0x80] sm:$0xff]
    %v1903 = vld [vmem:[%s3 + $0x88] sm:$0xff]
    %v1904 = vld [vmem:[%s3 + $0x90] sm:$0xff]
    %v1905 = vld [vmem:[%s3 + $0x98] sm:$0xff]
    %v1906 = vld [vmem:[%s3 + $0xa0] sm:$0xff]
    %v1907 = vld [vmem:[%s3 + $0xa8] sm:$0xff]
    %v1908 = vld [vmem:[%s3 + $0xb0] sm:$0xff]
    %v1909 = vld [vmem:[%s3 + $0xb8] sm:$0xff]
    %v1910 = vld [vmem:[%s3 + $0xc0] sm:$0xff]
    %v1911 = vld [vmem:[%s3 + $0xc8] sm:$0xff]
    %v1912 = vld [vmem:[%s3 + $0xd0] sm:$0xff]
    %v1913 = vld [vmem:[%s3 + $0xd8] sm:$0xff]
    %v1914 = vld [vmem:[%s3 + $0xe0] sm:$0xff]
    %v1915 = vld [vmem:[%s3 + $0xe8] sm:$0xff]
    %v1916 = vld [vmem:[%s3 + $0xf0] sm:$0xff]
    %v1917 = vld [vmem:[%s3 + $0xf8] sm:$0xff]
    %v1918 = vld [vmem:[%s3 + $0x100] sm:$0xff]
    %v1919 = vld [vmem:[%s3 + $0x108] sm:$0xff]
    %v1920 = vld [vmem:[%s3 + $0x110] sm:$0xff]
    %v1921 = vld [vmem:[%s3 + $0x118] sm:$0xff]
    %v1922 = vld [vmem:[%s3 + $0x120] sm:$0xff]
    %v1923 = vld [vmem:[%s3 + $0x128] sm:$0xff]
    %v1924 = vld [vmem:[%s3 + $0x130] sm:$0xff]
    %v1925 = vld [vmem:[%s3 + $0x138] sm:$0xff]
    %v1926 = vld [vmem:[%s3 + $0x140] sm:$0xff]
    %v1927 = vld [vmem:[%s3 + $0x148] sm:$0xff]
    %v1928 = vld [vmem:[%s3 + $0x150] sm:$0xff]
    %v1929 = vld [vmem:[%s3 + $0x158] sm:$0xff]
    %v1930 = vld [vmem:[%s3 + $0x160] sm:$0xff]
    %v1931 = vld [vmem:[%s3 + $0x168] sm:$0xff]
    %v1932 = vld [vmem:[%s3 + $0x170] sm:$0xff]
    %v1933 = vld [vmem:[%s3 + $0x178] sm:$0xff]
    %v1934 = vld [vmem:[%s3 + $0x180] sm:$0xff]
    %v1935 = vld [vmem:[%s3 + $0x188] sm:$0xff]
    %v1936 = vld [vmem:[%s3 + $0x190] sm:$0xff]
    %v1937 = vld [vmem:[%s3 + $0x198] sm:$0xff]
    %v1938 = vld [vmem:[%s3 + $0x1a0] sm:$0xff]
    %v1939 = vld [vmem:[%s3 + $0x1a8] sm:$0xff]
    %v1940 = vld [vmem:[%s3 + $0x1b0] sm:$0xff]
    %v1941 = vld [vmem:[%s3 + $0x1b8] sm:$0xff]
    %v1942 = vld [vmem:[%s3 + $0x1c0] sm:$0xff]
    %v1943 = vld [vmem:[%s3 + $0x1c8] sm:$0xff]
    %v1944 = vld [vmem:[%s3 + $0x1d0] sm:$0xff]
    %v1945 = vld [vmem:[%s3 + $0x1d8] sm:$0xff]
    %v1946 = vld [vmem:[%s3 + $0x1e0] sm:$0xff]
    %v1947 = vld [vmem:[%s3 + $0x1e8] sm:$0xff]
    %v1948 = vld [vmem:[%s3 + $0x1f0] sm:$0xff]
    %v1949 = vld [vmem:[%s3 + $0x1f8] sm:$0xff]
    %1950 = vmatpush.msra.mxu0 %v1946
    %1951 = vmatpush.msra.mxu0 %v1942
    %1952 = vmatpush.msra.mxu0 %v1938
    %1953 = vmatpush.msra.mxu0 %v1934
    %1954 = vmatpush.msra.mxu0 %v1930
    %1955 = vmatpush.msra.mxu0 %v1926
    %1956 = vmatpush.msra.mxu0 %v1922
    %1957 = vmatpush.msra.mxu0 %v1918
    %1958 = vmatpush.msra.mxu0 %v1914
    %1959 = vmatpush.msra.mxu0 %v1910
    %1960 = vmatpush.msra.mxu0 %v1906
    %1961 = vmatpush.msra.mxu0 %v1902
    %1962 = vmatpush.msra.mxu0 %v1898
    %1963 = vmatpush.msra.mxu0 %v1894
    %1964 = vmatpush.msra.mxu0 %v1890
    %1965 = vmatpush.msra.mxu0 %v1886
    %1966 = vmatmul.f32.gmra.mxu0 %v1874
    %v1967 = vpop.f32.mrf.mxu0
    %v1968 = vadd.f32 0.0, %v1967
    %1969 = vdwg.mxu0
    %1970 = vmatpush.msra.mxu0 %v1947
    %1971 = vmatpush.msra.mxu0 %v1943
    %1972 = vmatpush.msra.mxu0 %v1939
    %1973 = vmatpush.msra.mxu0 %v1935
    %1974 = vmatpush.msra.mxu0 %v1931
    %1975 = vmatpush.msra.mxu0 %v1927
    %1976 = vmatpush.msra.mxu0 %v1923
    %1977 = vmatpush.msra.mxu0 %v1919
    %1978 = vmatpush.msra.mxu0 %v1915
    %1979 = vmatpush.msra.mxu0 %v1911
    %1980 = vmatpush.msra.mxu0 %v1907
    %1981 = vmatpush.msra.mxu0 %v1903
    %1982 = vmatpush.msra.mxu0 %v1899
    %1983 = vmatpush.msra.mxu0 %v1895
    %1984 = vmatpush.msra.mxu0 %v1891
    %1985 = vmatpush.msra.mxu0 %v1887
    %1986 = vmatmul.f32.gmra.mxu0 %v1874
    %v1987 = vpop.f32.mrf.mxu0
    %v1988 = vadd.f32 0.0, %v1987
    %1989 = vdwg.mxu0
    %1990 = vmatpush.msra.mxu0 %v1948
    %1991 = vmatpush.msra.mxu0 %v1944
    %1992 = vmatpush.msra.mxu0 %v1940
    %1993 = vmatpush.msra.mxu0 %v1936
    %1994 = vmatpush.msra.mxu0 %v1932
    %1995 = vmatpush.msra.mxu0 %v1928
    %1996 = vmatpush.msra.mxu0 %v1924
    %1997 = vmatpush.msra.mxu0 %v1920
    %1998 = vmatpush.msra.mxu0 %v1916
    %1999 = vmatpush.msra.mxu0 %v1912
    %2000 = vmatpush.msra.mxu0 %v1908
    %2001 = vmatpush.msra.mxu0 %v1904
    %2002 = vmatpush.msra.mxu0 %v1900
    %2003 = vmatpush.msra.mxu0 %v1896
    %2004 = vmatpush.msra.mxu0 %v1892
    %2005 = vmatpush.msra.mxu0 %v1888
    %2006 = vmatmul.f32.gmra.mxu0 %v1874
    %v2007 = vpop.f32.mrf.mxu0
    %v2008 = vadd.f32 0.0, %v2007
    %2009 = vdwg.mxu0
    %2010 = vmatpush.msra.mxu0 %v1949
    %2011 = vmatpush.msra.mxu0 %v1945
    %2012 = vmatpush.msra.mxu0 %v1941
    %2013 = vmatpush.msra.mxu0 %v1937
    %2014 = vmatpush.msra.mxu0 %v1933
    %2015 = vmatpush.msra.mxu0 %v1929
    %2016 = vmatpush.msra.mxu0 %v1925
    %2017 = vmatpush.msra.mxu0 %v1921
    %2018 = vmatpush.msra.mxu0 %v1917
    %2019 = vmatpush.msra.mxu0 %v1913
    %2020 = vmatpush.msra.mxu0 %v1909
    %2021 = vmatpush.msra.mxu0 %v1905
    %2022 = vmatpush.msra.mxu0 %v1901
    %2023 = vmatpush.msra.mxu0 %v1897
    %2024 = vmatpush.msra.mxu0 %v1893
    %2025 = vmatpush.msra.mxu0 %v1889
    %2026 = vmatmul.f32.gmra.mxu0 %v1874
    %v2027 = vpop.f32.mrf.mxu0
    %v2028 = vadd.f32 0.0, %v2027
    %2029 = vdwg.mxu0
    %v2030 = vadd.f32 %v1882, %v1968
    %v2031 = vadd.f32 %v1883, %v1988
    %v2032 = vadd.f32 %v1884, %v2008
    %v2033 = vadd.f32 %v1885, %v2028
    %v2034 = vxor.u32 %v2030, 2147483648
    %v2035 = vmul.f32 %v2034, 1.442695
    %v2036 = vpow.pop %v2035
    %v2037 = vadd.f32 %v2036, 1.0
    %v2038 = vrcp.pop %v2037
    %v2039 = vmul.f32 %v2037, %v2038
    %v2040 = vsub.f32 1.0, %v2039
    %v2041 = vmul.f32 %v2038, %v2040
    %v2042 = vadd.f32 %v2038, %v2041
    %vm2043 = vweird.f32 %v2037
    %vm2044 = vweird.f32 %v2038
    %vm2045 = vmor %vm2043, %vm2044
    %v2046 = vsel %vm2045, %v2038, %v2042
    %v2047 = vand.u32 2147483647, %v2037
    %vm2048 = vcmp.eq.f32.partialorder %v2047, 8.507059e+37
    %v2049 = vand.u32 %v2037, 2147483648
    %v2050 = vor.u32 1.1754944e-38, %v2049
    %v2051 = vsel %vm2048, %v2050, %v2046
    %v2052 = vmul.f32 1.0, %v2051
    %v2053 = vxor.u32 %v2031, 2147483648
    %v2054 = vmul.f32 %v2053, 1.442695
    %v2055 = vpow.pop %v2054
    %v2056 = vadd.f32 %v2055, 1.0
    %v2057 = vrcp.pop %v2056
    %v2058 = vmul.f32 %v2056, %v2057
    %v2059 = vsub.f32 1.0, %v2058
    %v2060 = vmul.f32 %v2057, %v2059
    %v2061 = vadd.f32 %v2057, %v2060
    %vm2062 = vweird.f32 %v2056
    %vm2063 = vweird.f32 %v2057
    %vm2064 = vmor %vm2062, %vm2063
    %v2065 = vsel %vm2064, %v2057, %v2061
    %v2066 = vand.u32 2147483647, %v2056
    %vm2067 = vcmp.eq.f32.partialorder %v2066, 8.507059e+37
    %v2068 = vand.u32 %v2056, 2147483648
    %v2069 = vor.u32 1.1754944e-38, %v2068
    %v2070 = vsel %vm2067, %v2069, %v2065
    %v2071 = vmul.f32 1.0, %v2070
    %v2072 = vtanh.pop %v2032
    %v2073 = vxor.u32 %v2033, 2147483648
    %v2074 = vmul.f32 %v2073, 1.442695
    %v2075 = vpow.pop %v2074
    %v2076 = vadd.f32 %v2075, 1.0
    %v2077 = vrcp.pop %v2076
    %v2078 = vmul.f32 %v2076, %v2077
    %v2079 = vsub.f32 1.0, %v2078
    %v2080 = vmul.f32 %v2077, %v2079
    %v2081 = vadd.f32 %v2077, %v2080
    %vm2082 = vweird.f32 %v2076
    %vm2083 = vweird.f32 %v2077
    %vm2084 = vmor %vm2082, %vm2083
    %v2085 = vsel %vm2084, %v2077, %v2081
    %v2086 = vand.u32 2147483647, %v2076
    %vm2087 = vcmp.eq.f32.partialorder %v2086, 8.507059e+37
    %v2088 = vand.u32 %v2076, 2147483648
    %v2089 = vor.u32 1.1754944e-38, %v2088
    %v2090 = vsel %vm2087, %v2089, %v2085
    %v2091 = vmul.f32 1.0, %v2090
    %v2092 = vmul.f32 %v2071, %v1872
    %v2093 = vmul.f32 %v2052, %v2072
    %v2094 = vadd.f32 %v2092, %v2093
    %v2095 = vtanh.pop %v2094
    %v2096 = vmul.f32 %v2091, %v2095
    %s2097 = scalar_lea.vmem [#allocation3], 56
    %2098 = vst [vmem:[%s2097] sm:$0xff] %v2096
    %2099 = vst [vmem:[#allocation4] sm:$0xff] %v2096
    %v2100 = vld [vmem:[#allocation3] sm:$0xff]
    %v2101 = vld [vmem:[#allocation3 + $0x8] sm:$0xff]
    %v2102 = vld [vmem:[#allocation3 + $0x10] sm:$0xff]
    %v2103 = vld [vmem:[#allocation3 + $0x18] sm:$0xff]
    %v2104 = vld [vmem:[#allocation3 + $0x20] sm:$0xff]
    %v2105 = vld [vmem:[#allocation3 + $0x28] sm:$0xff]
    %v2106 = vld [vmem:[#allocation3 + $0x30] sm:$0xff]
    %v2107 = vld [vmem:[#allocation3 + $0x38] sm:$0xff]
    %v2108 = vld [vmem:[#allocation7] sm:$0xff]
    %v2109 = vld [vmem:[#allocation7 + $0x8] sm:$0xff]
    %v2110 = vld [vmem:[#allocation7 + $0x10] sm:$0xff]
    %v2111 = vld [vmem:[#allocation7 + $0x18] sm:$0xff]
    %v2112 = vld [vmem:[#allocation7 + $0x20] sm:$0xff]
    %v2113 = vld [vmem:[#allocation7 + $0x28] sm:$0xff]
    %v2114 = vld [vmem:[#allocation7 + $0x30] sm:$0xff]
    %v2115 = vld [vmem:[#allocation7 + $0x38] sm:$0xff]
    %v2116 = vld [vmem:[#allocation7 + $0x40] sm:$0xff]
    %v2117 = vld [vmem:[#allocation7 + $0x48] sm:$0xff]
    %v2118 = vld [vmem:[#allocation7 + $0x50] sm:$0xff]
    %v2119 = vld [vmem:[#allocation7 + $0x58] sm:$0xff]
    %v2120 = vld [vmem:[#allocation7 + $0x60] sm:$0xff]
    %v2121 = vld [vmem:[#allocation7 + $0x68] sm:$0xff]
    %v2122 = vld [vmem:[#allocation7 + $0x70] sm:$0xff]
    %v2123 = vld [vmem:[#allocation7 + $0x78] sm:$0xff]
    %v2124 = vld [vmem:[#allocation4] sm:$0xff]
    %v2125 = vld [vmem:[#allocation4 + $0x8] sm:$0xff]
    %v2126 = vld [vmem:[#allocation4 + $0x10] sm:$0xff]
    %v2127 = vld [vmem:[#allocation4 + $0x18] sm:$0xff]
    %v2128 = vld [vmem:[#allocation4 + $0x20] sm:$0xff]
    %v2129 = vld [vmem:[#allocation4 + $0x28] sm:$0xff]
    %v2130 = vld [vmem:[#allocation4 + $0x30] sm:$0xff]
    %v2131 = vld [vmem:[#allocation4 + $0x38] sm:$0xff]
    %v2132 = vld [vmem:[#allocation7 + $0x80] sm:$0xff]
    %v2133 = vld [vmem:[#allocation7 + $0x88] sm:$0xff]
    %v2134 = vld [vmem:[#allocation7 + $0x90] sm:$0xff]
    %v2135 = vld [vmem:[#allocation7 + $0x98] sm:$0xff]
    %v2136 = vld [vmem:[#allocation7 + $0xa0] sm:$0xff]
    %v2137 = vld [vmem:[#allocation7 + $0xa8] sm:$0xff]
    %v2138 = vld [vmem:[#allocation7 + $0xb0] sm:$0xff]
    %v2139 = vld [vmem:[#allocation7 + $0xb8] sm:$0xff]
    %v2140 = vld [vmem:[#allocation7 + $0xc0] sm:$0xff]
    %v2141 = vld [vmem:[#allocation7 + $0xc8] sm:$0xff]
    %v2142 = vld [vmem:[#allocation7 + $0xd0] sm:$0xff]
    %v2143 = vld [vmem:[#allocation7 + $0xd8] sm:$0xff]
    %v2144 = vld [vmem:[#allocation7 + $0xe0] sm:$0xff]
    %v2145 = vld [vmem:[#allocation7 + $0xe8] sm:$0xff]
    %v2146 = vld [vmem:[#allocation7 + $0xf0] sm:$0xff]
    %v2147 = vld [vmem:[#allocation7 + $0xf8] sm:$0xff]
    %2148 = vmatpush.msra.mxu0 %v2147
    %2149 = vmatpush.msra.mxu0 %v2146
    %2150 = vmatpush.msra.mxu0 %v2145
    %2151 = vmatpush.msra.mxu0 %v2144
    %2152 = vmatpush.msra.mxu0 %v2143
    %2153 = vmatpush.msra.mxu0 %v2142
    %2154 = vmatpush.msra.mxu0 %v2141
    %2155 = vmatpush.msra.mxu0 %v2140
    %2156 = vmatpush.msra.mxu0 %v2139
    %2157 = vmatpush.msra.mxu0 %v2138
    %2158 = vmatpush.msra.mxu0 %v2137
    %2159 = vmatpush.msra.mxu0 %v2136
    %2160 = vmatpush.msra.mxu0 %v2135
    %2161 = vmatpush.msra.mxu0 %v2134
    %2162 = vmatpush.msra.mxu0 %v2133
    %2163 = vmatpush.msra.mxu0 %v2132
    %2164 = vmatmul.f32.gmra.mxu0 %v2124
    %v2165 = vpop.f32.mrf.mxu0
    %v2166 = vadd.f32 0.0, %v2165
    %2167 = vmatmul.f32.gmra.mxu0 %v2125
    %v2168 = vpop.f32.mrf.mxu0
    %v2169 = vadd.f32 0.0, %v2168
    %2170 = vmatmul.f32.gmra.mxu0 %v2126
    %v2171 = vpop.f32.mrf.mxu0
    %v2172 = vadd.f32 0.0, %v2171
    %2173 = vmatmul.f32.gmra.mxu0 %v2127
    %v2174 = vpop.f32.mrf.mxu0
    %v2175 = vadd.f32 0.0, %v2174
    %2176 = vmatmul.f32.gmra.mxu0 %v2128
    %v2177 = vpop.f32.mrf.mxu0
    %v2178 = vadd.f32 0.0, %v2177
    %2179 = vmatmul.f32.gmra.mxu0 %v2129
    %v2180 = vpop.f32.mrf.mxu0
    %v2181 = vadd.f32 0.0, %v2180
    %2182 = vmatmul.f32.gmra.mxu0 %v2130
    %v2183 = vpop.f32.mrf.mxu0
    %v2184 = vadd.f32 0.0, %v2183
    %2185 = vmatmul.f32.gmra.mxu0 %v2131
    %v2186 = vpop.f32.mrf.mxu0
    %v2187 = vadd.f32 0.0, %v2186
    %2188 = vdwg.mxu0
    %2189 = vmatpush.msra.mxu0 %v2123
    %2190 = vmatpush.msra.mxu0 %v2122
    %2191 = vmatpush.msra.mxu0 %v2121
    %2192 = vmatpush.msra.mxu0 %v2120
    %2193 = vmatpush.msra.mxu0 %v2119
    %2194 = vmatpush.msra.mxu0 %v2118
    %2195 = vmatpush.msra.mxu0 %v2117
    %2196 = vmatpush.msra.mxu0 %v2116
    %2197 = vmatpush.msra.mxu0 %v2115
    %2198 = vmatpush.msra.mxu0 %v2114
    %2199 = vmatpush.msra.mxu0 %v2113
    %2200 = vmatpush.msra.mxu0 %v2112
    %2201 = vmatpush.msra.mxu0 %v2111
    %2202 = vmatpush.msra.mxu0 %v2110
    %2203 = vmatpush.msra.mxu0 %v2109
    %2204 = vmatpush.msra.mxu0 %v2108
    %2205 = vmatmul.f32.gmra.mxu0 %v2100
    %v2206 = vpop.f32.mrf.mxu0
    %v2207 = vadd.f32 %v2166, %v2206
    %2208 = vmatmul.f32.gmra.mxu0 %v2101
    %v2209 = vpop.f32.mrf.mxu0
    %v2210 = vadd.f32 %v2169, %v2209
    %2211 = vmatmul.f32.gmra.mxu0 %v2102
    %v2212 = vpop.f32.mrf.mxu0
    %v2213 = vadd.f32 %v2172, %v2212
    %2214 = vmatmul.f32.gmra.mxu0 %v2103
    %v2215 = vpop.f32.mrf.mxu0
    %v2216 = vadd.f32 %v2175, %v2215
    %2217 = vmatmul.f32.gmra.mxu0 %v2104
    %v2218 = vpop.f32.mrf.mxu0
    %v2219 = vadd.f32 %v2178, %v2218
    %2220 = vmatmul.f32.gmra.mxu0 %v2105
    %v2221 = vpop.f32.mrf.mxu0
    %v2222 = vadd.f32 %v2181, %v2221
    %2223 = vmatmul.f32.gmra.mxu0 %v2106
    %v2224 = vpop.f32.mrf.mxu0
    %v2225 = vadd.f32 %v2184, %v2224
    %2226 = vmatmul.f32.gmra.mxu0 %v2107
    %v2227 = vpop.f32.mrf.mxu0
    %v2228 = vadd.f32 %v2187, %v2227
    %2229 = vdwg.mxu0
    %v2230 = vld [vmem:[%s5] sm:$0x1]
    %v2232 = vperm.slane %v2230, 0
    %v2234 = vadd.f32 %v2207, %v2232
    %v2235 = vadd.f32 %v2210, %v2232
    %v2236 = vadd.f32 %v2213, %v2232
    %v2237 = vadd.f32 %v2216, %v2232
    %v2238 = vadd.f32 %v2219, %v2232
    %v2239 = vadd.f32 %v2222, %v2232
    %v2240 = vadd.f32 %v2225, %v2232
    %v2241 = vadd.f32 %v2228, %v2232
    %2242 = vst [vmem:[%s6] sm:$0xff] %v2234
    %2243 = vst [vmem:[%s6 + $0x8] sm:$0xff] %v2235
    %2244 = vst [vmem:[%s6 + $0x10] sm:$0xff] %v2236
    %2245 = vst [vmem:[%s6 + $0x18] sm:$0xff] %v2237
    %2246 = vst [vmem:[%s6 + $0x20] sm:$0xff] %v2238
    %2247 = vst [vmem:[%s6 + $0x28] sm:$0xff] %v2239
    %2248 = vst [vmem:[%s6 + $0x30] sm:$0xff] %v2240
    %2249 = vst [vmem:[%s6 + $0x38] sm:$0xff] %v2241
    // Predicated region
    $region34: #{bilstm_forward.1} parent=1 // pred_check
      _
    $region35: #{bilstm_forward.1} parent=1 // pred_check_branch
      %2251 = sbr.rel (0) target = $region37
    $region36: #{bilstm_forward.1} parent=1 // pred_region
      _
    $region37: #{bilstm_forward.1} parent=1 // pred_fallthru
      _
    // Predicated region
    $region38: #{bilstm_forward.1} parent=1 // pred_check
      _
    $region39: #{bilstm_forward.1} parent=1 // pred_check_branch
      %2253 = sbr.rel (0) target = $region41
    $region40: #{bilstm_forward.1} parent=1 // pred_region
      _
    $region41: #{bilstm_forward.1} parent=1 // pred_fallthru
      _
    %2254 = vsyncpa [#allocation6], 1
    %2255 = vsyncpa [#allocation8], 1

</llo_original>
